<compile_context>
chip_gen: v6e
topology: v6e:2x2x1
jax: 0.10.0
libtpu: 0.0.40
codegen_flags: <defaults>
</compile_context>

<pallas_src>
import functools

import jax
import jax.numpy as jnp
from jax import lax
from jax.experimental import pallas as pl
from jax.experimental.pallas import tpu as pltpu


def _conv_stats_kernel(xp_ref, w_ref, out_ref, sum_ref, sumsq_ref, *, H, W, Cin, Cout):
    """3x3 conv (input pre-padded) via one im2col matmul + per-image BN partial stats.

    Grid axis 0 is the batch ("parallel"): each step writes its own conv tile and its own
    (1, 1, Cout) partial sum / sum-of-squares; the cross-image reduction is done in the
    wrapper (N*Cout elements, negligible).
    """
    x = xp_ref[0]                                            # (H+2, W+2, Cin) f32
    # im2col: 9 shifted windows concatenated along the channel axis -> a single MXU push
    # with K = 9*Cin instead of nine K = Cin pushes.
    slabs = []
    for ky in range(3):
        for kx in range(3):
            slabs.append(x[ky:ky + H, kx:kx + W, :].reshape(H * W, Cin))
    patches = jnp.concatenate(slabs, axis=1)                 # (H*W, 9*Cin) f32
    acc = jnp.dot(patches.astype(jnp.bfloat16), w_ref[...],  # bf16 MXU operands
                  preferred_element_type=jnp.float32)        # (H*W, Cout) f32 accumulation

    # Per-image partial statistics in f32. Hierarchical (per-image, then cross-image)
    # accumulation keeps the E[x^2] - E[x]^2 cancellation error small.
    sum_ref[...] = jnp.sum(acc, axis=0, keepdims=True).reshape(1, 1, Cout)
    sumsq_ref[...] = jnp.sum(acc * acc, axis=0, keepdims=True).reshape(1, 1, Cout)

    # bf16 intermediate: it is written to HBM and immediately re-read by the BN pass.
    out_ref[...] = acc.reshape(1, H, W, Cout).astype(out_ref.dtype)


def _bn_relu_kernel(y_ref, scale_ref, shift_ref, o_ref):
    """Fused (y * scale + shift) -> ReLU on a lane-dense (rows, W*Cout) view."""
    y = y_ref[...].astype(jnp.float32)                       # (TR, L)
    o = y * scale_ref[...] + shift_ref[...]                  # scale/shift: (1, L) broadcast
    o_ref[...] = jnp.maximum(o, 0.0).astype(o_ref.dtype)


def _row_tile(rows, target=512):
    """Largest row tile <= target that tiles `rows` exactly (multiple of 8, else full extent)."""
    if rows <= target:
        return rows
    t = (target // 8) * 8
    while t >= 8 and rows % t != 0:
        t -= 8
    return t if t >= 8 else rows


def conv_batchnorm_relu(x_nchw, w_oihw, bias, gamma, beta, eps=1e-5):
    """Forward of ConvBatchNorm.  x_nchw: (N, Cin, H, W) -> (N, Cout, H, W)."""
    del bias  # Cancels exactly under training-mode BatchNorm (it only shifts the per-channel
              # mean, which is subtracted), so it is intentionally not applied.
    N, Cin, H, W = x_nchw.shape
    Cout = w_oihw.shape[0]

    # Layout glue (NHWC internally) + spatial zero padding for the 3x3 / pad=1 conv.
    # TODO(synk): fold the NCHW<->NHWC transposes, the padding and H-row tiling (2-row halo)
    # into the conv kernel's index_map so large images don't need a whole padded image per
    # grid step and the wrapper-side HBM round trips disappear.
    x = jnp.transpose(x_nchw, (0, 2, 3, 1)).astype(jnp.float32)       # (N, H, W, Cin)
    xp = jnp.pad(x, ((0, 0), (1, 1), (1, 1), (0, 0)))                 # (N, H+2, W+2, Cin)
    # (Cout, Cin, 3, 3) -> rows ordered (ky, kx, Cin), matching the im2col column order.
    w_mat = jnp.transpose(w_oihw, (2, 3, 1, 0)).reshape(9 * Cin, Cout).astype(jnp.bfloat16)

    conv_kernel = functools.partial(_conv_stats_kernel, H=H, W=W, Cin=Cin, Cout=Cout)
    conv_out, psum, psumsq = pl.pallas_call(
        conv_kernel,
        out_shape=(
            jax.ShapeDtypeStruct((N, H, W, Cout), jnp.bfloat16),      # bf16 intermediate
            jax.ShapeDtypeStruct((N, 1, Cout), jnp.float32),          # per-image sum
            jax.ShapeDtypeStruct((N, 1, Cout), jnp.float32),          # per-image sum of squares
        ),
        grid=(N,),
        in_specs=[
            pl.BlockSpec((1, H + 2, W + 2, Cin), lambda n: (n, 0, 0, 0)),
            pl.BlockSpec((9 * Cin, Cout), lambda n: (0, 0)),
        ],
        out_specs=(
            pl.BlockSpec((1, H, W, Cout), lambda n: (n, 0, 0, 0)),
            pl.BlockSpec((1, 1, Cout), lambda n: (n, 0, 0)),
            pl.BlockSpec((1, 1, Cout), lambda n: (n, 0, 0)),
        ),
        compiler_params=pltpu.CompilerParams(
            dimension_semantics=("parallel",),        # no cross-step state -> both TCs on v7x
            vmem_limit_bytes=32 * 1024 * 1024),
    )(xp, w_mat)

    # Tiny cross-image reduction + BN scale/shift in plain JAX (N*Cout elements).
    count = float(N * H * W)
    mean = jnp.sum(psum, axis=(0, 1)) / count                         # (Cout,)
    var = jnp.sum(psumsq, axis=(0, 1)) / count - mean * mean          # biased (training-mode BN)
    var = jnp.maximum(var, 0.0)                                       # guard fp cancellation
    scale = gamma * lax.rsqrt(var + eps)                              # (Cout,)
    shift = beta - mean * scale                                       # (Cout,)

    # BN + ReLU on a lane-dense flattened view: last dim W*Cout with large row tiles.
    R, L = N * H, W * Cout
    y2 = conv_out.reshape(R, L)                                       # contiguous -> free reshape
    scale_row = jnp.tile(scale, W).reshape(1, L)                      # lane j -> channel j % Cout
    shift_row = jnp.tile(shift, W).reshape(1, L)
    TR = _row_tile(R)

    out2 = pl.pallas_call(
        _bn_relu_kernel,
        out_shape=jax.ShapeDtypeStruct((R, L), jnp.float32),
        grid=(R // TR,),
        in_specs=[
            pl.BlockSpec((TR, L), lambda r: (r, 0)),
            pl.BlockSpec((1, L), lambda r: (0, 0)),
            pl.BlockSpec((1, L), lambda r: (0, 0)),
        ],
        out_specs=pl.BlockSpec((TR, L), lambda r: (r, 0)),
        compiler_params=pltpu.CompilerParams(
            dimension_semantics=("parallel",),
            vmem_limit_bytes=32 * 1024 * 1024),
    )(y2, scale_row, shift_row)

    out_nhwc = out2.reshape(N, H, W, Cout)
    return jnp.transpose(out_nhwc, (0, 3, 1, 2))                      # back to NCHW


def _reference(x_nchw, w_oihw, bias, gamma, beta, eps=1e-5, conv_dtype=jnp.float32):
    """Pure-JAX reference (conv -> training-mode BN -> ReLU)."""
    y = lax.conv_general_dilated(
        x_nchw.astype(conv_dtype), w_oihw.astype(conv_dtype),
        window_strides=(1, 1), padding=((1, 1), (1, 1)),
        dimension_numbers=("NCHW", "OIHW", "NCHW"),
        preferred_element_type=jnp.float32)
    y = y + bias[None, :, None, None]
    mean = y.mean(axis=(0, 2, 3), keepdims=True)
    var = y.var(axis=(0, 2, 3), keepdims=True)                        # biased, as training BN
    yn = (y - mean) * lax.rsqrt(var + eps)
    yn = yn * gamma[None, :, None, None] + beta[None, :, None, None]
    return jnp.maximum(yn, 0.0)


if __name__ == "__main__":
    N, Cin, Cout, H, W = 2, 4, 8, 16, 16

    key = jax.random.PRNGKey(0)
    kx, kw, kb = jax.random.split(key, 3)
    x = jax.random.normal(kx, (N, Cin, H, W), dtype=jnp.float32)
    # Deterministic parameter init (synthetic; shapes match nn.Conv2d / nn.BatchNorm2d).
    w = 0.1 * jax.random.normal(kw, (Cout, Cin, 3, 3), dtype=jnp.float32)
    b = 0.1 * jax.random.normal(kb, (Cout,), dtype=jnp.float32)
    gamma = jnp.ones((Cout,), jnp.float32)     # BatchNorm2d default weight
    beta = jnp.zeros((Cout,), jnp.float32)     # BatchNorm2d default bias

    out = jax.block_until_ready(conv_batchnorm_relu(x, w, b, gamma, beta))
    assert out.shape == (N, Cout, H, W)

    # bf16 MXU operands + bf16 intermediate give ~1e-2 worst-case abs error vs the full-f32
    # reference at these magnitudes; the bf16-operand reference is a tighter check.
    ref_f32 = _reference(x, w, b, gamma, beta)
    ref_bf16 = _reference(x, w, b, gamma, beta, conv_dtype=jnp.bfloat16)
    assert jnp.max(jnp.abs(out - ref_f32)) < 5e-2, "mismatch vs f32 reference"
    assert jnp.max(jnp.abs(out - ref_bf16)) < 2e-2, "mismatch vs bf16-operand reference"

    print("KERNEL_OK")
</pallas_src>

<mosaic_0001>
module attributes {stable_mosaic.version = 11 : i64} {
  func.func @_conv_stats_kernel(%arg0: i32, %arg1: memref<1x18x18x4xf32, #tpu.memory_space<vmem>>, %arg2: memref<36x8xbf16, #tpu.memory_space<vmem>>, %arg3: memref<1x16x16x8xbf16, #tpu.memory_space<vmem>>, %arg4: memref<1x1x8xf32, #tpu.memory_space<vmem>>, %arg5: memref<1x1x8xf32, #tpu.memory_space<vmem>>) attributes {dimension_semantics = [#tpu.dimension_semantics<parallel>], iteration_bounds = array<i64: 2>, scalar_prefetch = 0 : i64, scratch_operands = 0 : i64, tpu.core_type = #tpu.core_type<tc>, window_params = [{transform_indices = @transform_0, window_bounds = array<i64: 1, 18, 18, 4>}, {pipeline_mode = #tpu.pipeline_mode<synchronous>, transform_indices = @transform_1, window_bounds = array<i64: 36, 8>}, {transform_indices = @transform_2, window_bounds = array<i64: 1, 16, 16, 8>}, {transform_indices = @transform_3, window_bounds = array<i64: 1, 1, 8>}, {transform_indices = @transform_4, window_bounds = array<i64: 1, 1, 8>}]} {
    %c0 = arith.constant 0 : index
    %c0_0 = arith.constant 0 : index
    %c0_1 = arith.constant 0 : index
    %c0_2 = arith.constant 0 : index
    %0 = vector.load %arg1[%c0, %c0_0, %c0_1, %c0_2] : memref<1x18x18x4xf32, #tpu.memory_space<vmem>>, vector<1x18x18x4xf32>
    %1 = vector.shape_cast %0 : vector<1x18x18x4xf32> to vector<18x18x4xf32>
    %2 = vector.extract_strided_slice %1 {offsets = [0, 0, 0], sizes = [16, 16, 4], strides = [1, 1, 1]} : vector<18x18x4xf32> to vector<16x16x4xf32>
    %3 = vector.shape_cast %2 : vector<16x16x4xf32> to vector<256x4xf32>
    %4 = vector.extract_strided_slice %1 {offsets = [0, 1, 0], sizes = [16, 16, 4], strides = [1, 1, 1]} : vector<18x18x4xf32> to vector<16x16x4xf32>
    %5 = vector.shape_cast %4 : vector<16x16x4xf32> to vector<256x4xf32>
    %6 = vector.extract_strided_slice %1 {offsets = [0, 2, 0], sizes = [16, 16, 4], strides = [1, 1, 1]} : vector<18x18x4xf32> to vector<16x16x4xf32>
    %7 = vector.shape_cast %6 : vector<16x16x4xf32> to vector<256x4xf32>
    %8 = vector.extract_strided_slice %1 {offsets = [1, 0, 0], sizes = [16, 16, 4], strides = [1, 1, 1]} : vector<18x18x4xf32> to vector<16x16x4xf32>
    %9 = vector.shape_cast %8 : vector<16x16x4xf32> to vector<256x4xf32>
    %10 = vector.extract_strided_slice %1 {offsets = [1, 1, 0], sizes = [16, 16, 4], strides = [1, 1, 1]} : vector<18x18x4xf32> to vector<16x16x4xf32>
    %11 = vector.shape_cast %10 : vector<16x16x4xf32> to vector<256x4xf32>
    %12 = vector.extract_strided_slice %1 {offsets = [1, 2, 0], sizes = [16, 16, 4], strides = [1, 1, 1]} : vector<18x18x4xf32> to vector<16x16x4xf32>
    %13 = vector.shape_cast %12 : vector<16x16x4xf32> to vector<256x4xf32>
    %14 = vector.extract_strided_slice %1 {offsets = [2, 0, 0], sizes = [16, 16, 4], strides = [1, 1, 1]} : vector<18x18x4xf32> to vector<16x16x4xf32>
    %15 = vector.shape_cast %14 : vector<16x16x4xf32> to vector<256x4xf32>
    %16 = vector.extract_strided_slice %1 {offsets = [2, 1, 0], sizes = [16, 16, 4], strides = [1, 1, 1]} : vector<18x18x4xf32> to vector<16x16x4xf32>
    %17 = vector.shape_cast %16 : vector<16x16x4xf32> to vector<256x4xf32>
    %18 = vector.extract_strided_slice %1 {offsets = [2, 2, 0], sizes = [16, 16, 4], strides = [1, 1, 1]} : vector<18x18x4xf32> to vector<16x16x4xf32>
    %19 = vector.shape_cast %18 : vector<16x16x4xf32> to vector<256x4xf32>
    %20 = tpu.concatenate %3, %5, %7, %9, %11, %13, %15, %17, %19 in 1 : vector<256x4xf32>, vector<256x4xf32>, vector<256x4xf32>, vector<256x4xf32>, vector<256x4xf32>, vector<256x4xf32>, vector<256x4xf32>, vector<256x4xf32>, vector<256x4xf32> -> vector<256x36xf32>
    %21 = arith.truncf %20 : vector<256x36xf32> to vector<256x36xbf16>
    %c0_3 = arith.constant 0 : index
    %c0_4 = arith.constant 0 : index
    %22 = vector.load %arg2[%c0_3, %c0_4] : memref<36x8xbf16, #tpu.memory_space<vmem>>, vector<36x8xbf16>
    %cst = arith.constant dense<0.000000e+00> : vector<256x8xf32>
    %23 = tpu.matmul %21, %22, %cst {dimension_numbers = #tpu.dot_dimension_numbers<[1], [0], [0], [1], [0, 0, 1, 1], [], []>} : vector<256x36xbf16>, vector<36x8xbf16>, vector<256x8xf32> -> vector<256x8xf32>
    %cst_5 = arith.constant dense<0.000000e+00> : vector<8xf32>
    %24 = vector.multi_reduction <add>, %23, %cst_5 [0] : vector<256x8xf32> to vector<8xf32>
    %25 = vector.shape_cast %24 : vector<8xf32> to vector<1x8xf32>
    %26 = vector.shape_cast %25 : vector<1x8xf32> to vector<1x1x8xf32>
    %c0_6 = arith.constant 0 : index
    %c0_7 = arith.constant 0 : index
    %c0_8 = arith.constant 0 : index
    %27 = vector.load %arg4[%c0_6, %c0_7, %c0_8] : memref<1x1x8xf32, #tpu.memory_space<vmem>>, vector<1x1x8xf32>
    tpu.vector_store %arg4[%c0_6, %c0_7, %c0_8], %26 {strides = array<i32>} : memref<1x1x8xf32, #tpu.memory_space<vmem>>, vector<1x1x8xf32>,
    %28 = arith.mulf %23, %23 : vector<256x8xf32>
    %cst_9 = arith.constant dense<0.000000e+00> : vector<8xf32>
    %29 = vector.multi_reduction <add>, %28, %cst_9 [0] : vector<256x8xf32> to vector<8xf32>
    %30 = vector.shape_cast %29 : vector<8xf32> to vector<1x8xf32>
    %31 = vector.shape_cast %30 : vector<1x8xf32> to vector<1x1x8xf32>
    %c0_10 = arith.constant 0 : index
    %c0_11 = arith.constant 0 : index
    %c0_12 = arith.constant 0 : index
    %32 = vector.load %arg5[%c0_10, %c0_11, %c0_12] : memref<1x1x8xf32, #tpu.memory_space<vmem>>, vector<1x1x8xf32>
    tpu.vector_store %arg5[%c0_10, %c0_11, %c0_12], %31 {strides = array<i32>} : memref<1x1x8xf32, #tpu.memory_space<vmem>>, vector<1x1x8xf32>,
    %33 = vector.shape_cast %23 : vector<256x8xf32> to vector<1x16x16x8xf32>
    %34 = arith.truncf %33 : vector<1x16x16x8xf32> to vector<1x16x16x8xbf16>
    %c0_13 = arith.constant 0 : index
    %c0_14 = arith.constant 0 : index
    %c0_15 = arith.constant 0 : index
    %c0_16 = arith.constant 0 : index
    %35 = vector.load %arg3[%c0_13, %c0_14, %c0_15, %c0_16] : memref<1x16x16x8xbf16, #tpu.memory_space<vmem>>, vector<1x16x16x8xbf16>
    tpu.vector_store %arg3[%c0_13, %c0_14, %c0_15, %c0_16], %34 {strides = array<i32>} : memref<1x16x16x8xbf16, #tpu.memory_space<vmem>>, vector<1x16x16x8xbf16>,
    return
  }
  func.func @transform_0(%arg0: i32) -> (i32, i32, i32, i32) {
    %c0_i32 = arith.constant 0 : i32
    %c0_i32_0 = arith.constant 0 : i32
    %c0_i32_1 = arith.constant 0 : i32
    %c0_i32_2 = arith.constant 0 : i32
    return %arg0, %c0_i32, %c0_i32_0, %c0_i32_1 : i32, i32, i32, i32
  }
  func.func @transform_1(%arg0: i32) -> (i32, i32) {
    %c0_i32 = arith.constant 0 : i32
    %c0_i32_0 = arith.constant 0 : i32
    %c0_i32_1 = arith.constant 0 : i32
    return %c0_i32, %c0_i32_0 : i32, i32
  }
  func.func @transform_2(%arg0: i32) -> (i32, i32, i32, i32) {
    %c0_i32 = arith.constant 0 : i32
    %c0_i32_0 = arith.constant 0 : i32
    %c0_i32_1 = arith.constant 0 : i32
    %c0_i32_2 = arith.constant 0 : i32
    return %arg0, %c0_i32, %c0_i32_0, %c0_i32_1 : i32, i32, i32, i32
  }
  func.func @transform_3(%arg0: i32) -> (i32, i32, i32) {
    %c0_i32 = arith.constant 0 : i32
    %c0_i32_0 = arith.constant 0 : i32
    %c0_i32_1 = arith.constant 0 : i32
    return %arg0, %c0_i32, %c0_i32_0 : i32, i32, i32
  }
  func.func @transform_4(%arg0: i32) -> (i32, i32, i32) {
    %c0_i32 = arith.constant 0 : i32
    %c0_i32_0 = arith.constant 0 : i32
    %c0_i32_1 = arith.constant 0 : i32
    return %arg0, %c0_i32, %c0_i32_0 : i32, i32, i32
  }
}

</mosaic_0001>

<llo_original>
// kernel: tpu_custom_call.1
$region0: #{tpu_custom_call.1}
  #allocation0 [shape = 'u32[]', space=smem, size = 0x4, offset = 0x4, fixed_abs, tag = 'smem constant byte address 0x4 - core index']
  #allocation1 [shape = 'u32[144,128]{1,0:T(1,128)}', space=vmem, size = 0x12000, scoped, tag = 'internal scratch']
  %s0 = inlined_call_operand.vmem [shape: f32[2,18,18,4], index: 0, kind: input, shape index: {}]
  %s1 = inlined_call_operand.vmem [shape: bf16[36,8], index: 1, kind: input, shape index: {}]
  %s2 = inlined_call_operand.vmem [shape: bf16[2,16,16,8], index: 2, kind: output, shape index: {0}]
  %s3 = inlined_call_operand.hbm [shape: f32[2,1,8], index: 3, kind: output, shape index: {1}]
  %s4 = inlined_call_operand.hbm [shape: f32[2,1,8], index: 4, kind: output, shape index: {2}]
  %5 = xla_tuple %s2, %s3, %s4
  %s6 = sld [smem:[#allocation0]]
  $region57: #{tpu_custom_call.1} parent=0
    _
  %s8 = ssub.s32 1, %s6
  %s9 = scalar_select 0, %s8, %s6
  $region1: #{tpu_custom_call.1} parent=0
    #allocation2 [shape = 'u8[1024]{0}', space=vmem, size = 0x400, scoped, tag = 'output window, operand 1']
    #allocation3 [shape = 's32[2]{0}', space=sflag, size = 0x8, scoped, tag = 'scoped memory for tpu_custom_call.1']
    #allocation4 [shape = 'u8[1024]{0}', space=vmem, size = 0x400, scoped, tag = 'output window, operand 2']
    #allocation5 [shape = 's32[2]{0}', space=sflag, size = 0x8, scoped, tag = 'scoped memory for tpu_custom_call.1']
    %10 = vsyncpa [#allocation3], 0
    %s11 = scalar_lea.sflag [#allocation3], 1
    %12 = vsyncpa %s11, 0
    %13 = vsyncpa [#allocation5], 0
    %s14 = scalar_lea.sflag [#allocation5], 1
    %15 = vsyncpa %s14, 0
    loop: start=0, step=1, limit=4
    $region2: #{tpu_custom_call.1} parent=1 // loop_pre_header
      _
    $region3: #{tpu_custom_call.1} parent=1 // loop_header
      %s17 = sphi 0, %s21
      %p18 = scmp.ge.s32.totalorder %s17, 4
      %s27 = sphi 0, %s29
      %s30 = sphi 0, %s27
      %s31 = sphi 0, %s30
      %s47 = sphi 0, %s31
      %s51 = sphi 0, %s51
      %s53 = sphi 0, %s51
      %s54 = sphi 0, %s53
      %s68 = sphi 0, %s54
      %s74 = sphi 0, %s76
      %s77 = sphi 0, %s74
      %s78 = sphi 0, %s77
      %s94 = sphi 0, %s78
      %s100 = sphi 0, %s102
      %s103 = sphi 0, %s100
      %s104 = sphi 0, %s103
      %s120 = sphi 0, %s104
      %s126 = sphi 0, %s128
      %s129 = sphi 0, %s126
      %s130 = sphi 0, %s129
      %s146 = sphi 0, %s130
    $region4: #{tpu_custom_call.1} parent=1 // loop_header_branch
      %20 = sbr.rel (%p18) target = $region8
    $region5: #{tpu_custom_call.1} parent=1 // loop_body
      %s22 = ssub.s32 %s17, 1
      %s23 = ssub.s32 %s17, 2
      %s24 = sadd.s32 %s17, 1
      %s25 = ssub.s32 %s17, %s24
      %p26 = scmp.eq.s32.totalorder %s25, 0
      %s28 = sadd.s32 %s27, 1
      %s29 = scalar_select %p26, %s27, %s28
      %p32 = pneg %p26
      %p33 = scmp.eq.s32.totalorder %s17, 1
      %p34 = por %p32, %p33
      %p35 = scmp.ne.s32.totalorder %s27, %s30
      %p36 = scmp.eq.s32.totalorder %s17, 0
      %p37 = por %p35, %p36
      %p38 = scmp.ne.s32.totalorder %s27, %s30
      %p39 = scmp.eq.s32.totalorder %s22, 1
      %p40 = por %p38, %p39
      %p41 = scmp.ne.s32.totalorder %s30, %s31
      %p42 = scmp.eq.s32.totalorder %s22, 0
      %p43 = por %p41, %p42
      %p44 = scmp.ne.s32.totalorder %s30, %s31
      %p45 = scmp.eq.s32.totalorder %s23, 1
      %p46 = por %p44, %p45
      %p48 = scmp.ne.s32.totalorder %s31, %s47
      %p49 = scmp.eq.s32.totalorder %s23, 0
      %p50 = por %p48, %p49
      %s52 = sadd.s32 %s51, 1
      %p55 = scmp.eq.s32.totalorder %s17, 1
      %p56 = scmp.ne.s32.totalorder %s51, %s53
      %p57 = scmp.eq.s32.totalorder %s17, 0
      %p58 = por %p56, %p57
      %p59 = scmp.ne.s32.totalorder %s51, %s53
      %p60 = scmp.eq.s32.totalorder %s22, 1
      %p61 = por %p59, %p60
      %p62 = scmp.ne.s32.totalorder %s53, %s54
      %p63 = scmp.eq.s32.totalorder %s22, 0
      %p64 = por %p62, %p63
      %p65 = scmp.ne.s32.totalorder %s53, %s54
      %p66 = scmp.eq.s32.totalorder %s23, 1
      %p67 = por %p65, %p66
      %p69 = scmp.ne.s32.totalorder %s54, %s68
      %p70 = scmp.eq.s32.totalorder %s23, 0
      %p71 = por %p69, %p70
      %s72 = ssub.s32 %s17, %s24
      %p73 = scmp.eq.s32.totalorder %s72, 0
      %s75 = sadd.s32 %s74, 1
      %s76 = scalar_select %p73, %s74, %s75
      %p79 = pneg %p73
      %p80 = scmp.eq.s32.totalorder %s17, 1
      %p81 = por %p79, %p80
      %p82 = scmp.ne.s32.totalorder %s74, %s77
      %p83 = scmp.eq.s32.totalorder %s17, 0
      %p84 = por %p82, %p83
      %p85 = scmp.ne.s32.totalorder %s74, %s77
      %p86 = scmp.eq.s32.totalorder %s22, 1
      %p87 = por %p85, %p86
      %p88 = scmp.ne.s32.totalorder %s77, %s78
      %p89 = scmp.eq.s32.totalorder %s22, 0
      %p90 = por %p88, %p89
      %p91 = scmp.ne.s32.totalorder %s77, %s78
      %p92 = scmp.eq.s32.totalorder %s23, 1
      %p93 = por %p91, %p92
      %p95 = scmp.ne.s32.totalorder %s78, %s94
      %p96 = scmp.eq.s32.totalorder %s23, 0
      %p97 = por %p95, %p96
      %s98 = ssub.s32 %s17, %s24
      %p99 = scmp.eq.s32.totalorder %s98, 0
      %s101 = sadd.s32 %s100, 1
      %s102 = scalar_select %p99, %s100, %s101
      %p105 = pneg %p99
      %p106 = scmp.eq.s32.totalorder %s17, 1
      %p107 = por %p105, %p106
      %p108 = scmp.ne.s32.totalorder %s100, %s103
      %p109 = scmp.eq.s32.totalorder %s17, 0
      %p110 = por %p108, %p109
      %p111 = scmp.ne.s32.totalorder %s100, %s103
      %p112 = scmp.eq.s32.totalorder %s22, 1
      %p113 = por %p111, %p112
      %p114 = scmp.ne.s32.totalorder %s103, %s104
      %p115 = scmp.eq.s32.totalorder %s22, 0
      %p116 = por %p114, %p115
      %p117 = scmp.ne.s32.totalorder %s103, %s104
      %p118 = scmp.eq.s32.totalorder %s23, 1
      %p119 = por %p117, %p118
      %p121 = scmp.ne.s32.totalorder %s104, %s120
      %p122 = scmp.eq.s32.totalorder %s23, 0
      %p123 = por %p121, %p122
      %s124 = ssub.s32 %s17, %s24
      %p125 = scmp.eq.s32.totalorder %s124, 0
      %s127 = sadd.s32 %s126, 1
      %s128 = scalar_select %p125, %s126, %s127
      %p131 = pneg %p125
      %p132 = scmp.eq.s32.totalorder %s17, 1
      %p133 = por %p131, %p132
      %p134 = scmp.ne.s32.totalorder %s126, %s129
      %p135 = scmp.eq.s32.totalorder %s17, 0
      %p136 = por %p134, %p135
      %p137 = scmp.ne.s32.totalorder %s126, %s129
      %p138 = scmp.eq.s32.totalorder %s22, 1
      %p139 = por %p137, %p138
      %p140 = scmp.ne.s32.totalorder %s129, %s130
      %p141 = scmp.eq.s32.totalorder %s22, 0
      %p142 = por %p140, %p141
      %p143 = scmp.ne.s32.totalorder %s129, %s130
      %p144 = scmp.eq.s32.totalorder %s23, 1
      %p145 = por %p143, %p144
      %p147 = scmp.ne.s32.totalorder %s130, %s146
      %p148 = scmp.eq.s32.totalorder %s23, 0
      %p149 = por %p147, %p148
      %p150 = scmp.le.s32.totalorder 1, %s17
      %p151 = scmp.lt.s32.totalorder %s17, 3
      %p152 = pnand %p150, %p151
      %p153 = pneg %p152
      // Predicated region
      $region9: #{tpu_custom_call.1} parent=5 // pred_check
        _
      $region10: #{tpu_custom_call.1} parent=5 // pred_check_branch
        %155 = sbr.rel (%p152) target = $region12
      $region11: #{tpu_custom_call.1} parent=5 // pred_region
        %s156 = ssub.s32 %s17, 1
        // Predicated region
        $region13: #{tpu_custom_call.1} parent=11 // pred_check
          %p157 = pneg %p64
        $region14: #{tpu_custom_call.1} parent=11 // pred_check_branch
          %159 = sbr.rel (%p157) target = $region16
        $region15: #{tpu_custom_call.1} parent=11 // pred_region
          _
        $region16: #{tpu_custom_call.1} parent=11 // pred_fallthru
          _
      $region12: #{tpu_custom_call.1} parent=5 // pred_fallthru
        _
      %p160 = scmp.lt.s32.totalorder %s17, 2
      // Predicated region
      $region17: #{tpu_custom_call.1} parent=5 // pred_check
        %p161 = pneg %p160
      $region18: #{tpu_custom_call.1} parent=5 // pred_check_branch
        %163 = sbr.rel (%p161) target = $region20
      $region19: #{tpu_custom_call.1} parent=5 // pred_region
        // Predicated region
        $region21: #{tpu_custom_call.1} parent=19 // pred_check
          %p164 = pneg %p37
        $region22: #{tpu_custom_call.1} parent=19 // pred_check_branch
          %166 = sbr.rel (%p164) target = $region24
        $region23: #{tpu_custom_call.1} parent=19 // pred_region
          %p167 = scmp.lt.s32.totalorder %s17, 1
          %s168 = scalar_select %p167, %s17, 1
          %s169 = smul.addr %s168, 54
          %s170 = smul.addr %s169, 8
          %s171 = scalar_lea.vmem %s0, %s170
        $region24: #{tpu_custom_call.1} parent=19 // pred_fallthru
          _
      $region20: #{tpu_custom_call.1} parent=5 // pred_fallthru
        _
      %p172 = scmp.le.s32.totalorder 1, %s17
      %p173 = scmp.lt.s32.totalorder %s17, 3
      %p174 = pnand %p172, %p173
      %p175 = pneg %p174
      // Predicated region
      $region25: #{tpu_custom_call.1} parent=5 // pred_check
        _
      $region26: #{tpu_custom_call.1} parent=5 // pred_check_branch
        %177 = sbr.rel (%p174) target = $region28
      $region27: #{tpu_custom_call.1} parent=5 // pred_region
        %s178 = ssub.s32 %s17, 1
        %p179 = scmp.lt.s32.totalorder %s22, 1
        %s180 = scalar_select %p179, %s22, 1
        %s181 = smul.addr %s180, 54
        %s182 = smul.addr %s181, 8
        %s183 = scalar_lea.vmem %s0, %s182
        %p184 = pneg %p43
        %p185 = pneg %p40
        %p186 = pneg %p64
        %p187 = pneg %p61
        %p188 = pneg %p90
        %p189 = pneg %p87
        %p190 = scmp.lt.s32.totalorder %s22, 1
        %s191 = scalar_select %p190, %s22, 1
        %s192 = smul.addr %s191, 32
        %s193 = smul.addr %s192, 4
        %s194 = scalar_lea.vmem %s2, %s193
        %p195 = pneg %p116
        %p196 = pneg %p113
        %s197 = sand.u32 %s103, 1
        %s198 = scalar_lea.sflag [#allocation3], %s197
        %s199 = sand.u32 %s103, 1
        %s200 = scalar_lea.vmem [#allocation2], %s199
        %p201 = pneg %p142
        %p202 = pneg %p139
        %s203 = sand.u32 %s129, 1
        %s204 = scalar_lea.sflag [#allocation5], %s203
        %s205 = sand.u32 %s129, 1
        %s206 = scalar_lea.vmem [#allocation4], %s205
        %p207 = scmp.lt.s32.totalorder %s22, 1
        %s208 = scalar_select %p207, %s22, 1
        %s209 = smul.addr %s208, 54
        %s210 = smul.addr %s209, 8
        %s211 = scalar_lea.vmem %s0, %s210
        %p212 = scmp.lt.s32.totalorder %s22, 1
        %s213 = scalar_select %p212, %s22, 1
        %s214 = smul.addr %s213, 32
        %s215 = smul.addr %s214, 4
        %s216 = scalar_lea.vmem %s2, %s215
        %v218 = vld [vmem:[%s211] sm:$0xff]
        %v219 = vld [vmem:[%s211 + $0x8] sm:$0xff]
        %v220 = vld [vmem:[%s211 + $0x10] sm:$0x3]
        %v221 = vld [vmem:[%s211 + $0x18] sm:$0xff]
        %v222 = vld [vmem:[%s211 + $0x20] sm:$0xff]
        %v223 = vld [vmem:[%s211 + $0x28] sm:$0x3]
        %v224 = vld [vmem:[%s211 + $0x30] sm:$0xff]
        %v225 = vld [vmem:[%s211 + $0x38] sm:$0xff]
        %v226 = vld [vmem:[%s211 + $0x40] sm:$0x3]
        %v227 = vld [vmem:[%s211 + $0x48] sm:$0xff]
        %v228 = vld [vmem:[%s211 + $0x50] sm:$0xff]
        %v229 = vld [vmem:[%s211 + $0x58] sm:$0x3]
        %v230 = vld [vmem:[%s211 + $0x60] sm:$0xff]
        %v231 = vld [vmem:[%s211 + $0x68] sm:$0xff]
        %v232 = vld [vmem:[%s211 + $0x70] sm:$0x3]
        %v233 = vld [vmem:[%s211 + $0x78] sm:$0xff]
        %v234 = vld [vmem:[%s211 + $0x80] sm:$0xff]
        %v235 = vld [vmem:[%s211 + $0x88] sm:$0x3]
        %v236 = vld [vmem:[%s211 + $0x90] sm:$0xff]
        %v237 = vld [vmem:[%s211 + $0x98] sm:$0xff]
        %v238 = vld [vmem:[%s211 + $0xa0] sm:$0x3]
        %v239 = vld [vmem:[%s211 + $0xa8] sm:$0xff]
        %v240 = vld [vmem:[%s211 + $0xb0] sm:$0xff]
        %v241 = vld [vmem:[%s211 + $0xb8] sm:$0x3]
        %v242 = vld [vmem:[%s211 + $0xc0] sm:$0xff]
        %v243 = vld [vmem:[%s211 + $0xc8] sm:$0xff]
        %v244 = vld [vmem:[%s211 + $0xd0] sm:$0x3]
        %v245 = vld [vmem:[%s211 + $0xd8] sm:$0xff]
        %v246 = vld [vmem:[%s211 + $0xe0] sm:$0xff]
        %v247 = vld [vmem:[%s211 + $0xe8] sm:$0x3]
        %v248 = vld [vmem:[%s211 + $0xf0] sm:$0xff]
        %v249 = vld [vmem:[%s211 + $0xf8] sm:$0xff]
        %v250 = vld [vmem:[%s211 + $0x100] sm:$0x3]
        %v251 = vld [vmem:[%s211 + $0x108] sm:$0xff]
        %v252 = vld [vmem:[%s211 + $0x110] sm:$0xff]
        %v253 = vld [vmem:[%s211 + $0x118] sm:$0x3]
        %v254 = vld [vmem:[%s211 + $0x120] sm:$0xff]
        %v255 = vld [vmem:[%s211 + $0x128] sm:$0xff]
        %v256 = vld [vmem:[%s211 + $0x130] sm:$0x3]
        %v257 = vld [vmem:[%s211 + $0x138] sm:$0xff]
        %v258 = vld [vmem:[%s211 + $0x140] sm:$0xff]
        %v259 = vld [vmem:[%s211 + $0x148] sm:$0x3]
        %v260 = vld [vmem:[%s211 + $0x150] sm:$0xff]
        %v261 = vld [vmem:[%s211 + $0x158] sm:$0xff]
        %v262 = vld [vmem:[%s211 + $0x160] sm:$0x3]
        %v263 = vld [vmem:[%s211 + $0x168] sm:$0xff]
        %v264 = vld [vmem:[%s211 + $0x170] sm:$0xff]
        %v265 = vld [vmem:[%s211 + $0x178] sm:$0x3]
        %v266 = vld [vmem:[%s211 + $0x180] sm:$0xff]
        %v267 = vld [vmem:[%s211 + $0x188] sm:$0xff]
        %v268 = vld [vmem:[%s211 + $0x190] sm:$0x3]
        %v269 = vld [vmem:[%s211 + $0x198] sm:$0xff]
        %v270 = vld [vmem:[%s211 + $0x1a0] sm:$0xff]
        %v271 = vld [vmem:[%s211 + $0x1a8] sm:$0x3]
        %vm320 = vcmask 1046528
        %v321 = vrot.slane %v218, 1
        %v322 = vrot.slane %v219, 1
        %v323 = vsel %vm320, %v321, %v322
        %v324 = vrot.slane %v220, 1
        %v325 = vsel %vm320, %v322, %v324
        %v326 = vrot.slane %v221, 1
        %v327 = vrot.slane %v222, 1
        %v328 = vsel %vm320, %v326, %v327
        %v329 = vrot.slane %v223, 1
        %v330 = vsel %vm320, %v327, %v329
        %v331 = vrot.slane %v224, 1
        %v332 = vrot.slane %v225, 1
        %v333 = vsel %vm320, %v331, %v332
        %v334 = vrot.slane %v226, 1
        %v335 = vsel %vm320, %v332, %v334
        %v336 = vrot.slane %v227, 1
        %v337 = vrot.slane %v228, 1
        %v338 = vsel %vm320, %v336, %v337
        %v339 = vrot.slane %v229, 1
        %v340 = vsel %vm320, %v337, %v339
        %v341 = vrot.slane %v230, 1
        %v342 = vrot.slane %v231, 1
        %v343 = vsel %vm320, %v341, %v342
        %v344 = vrot.slane %v232, 1
        %v345 = vsel %vm320, %v342, %v344
        %v346 = vrot.slane %v233, 1
        %v347 = vrot.slane %v234, 1
        %v348 = vsel %vm320, %v346, %v347
        %v349 = vrot.slane %v235, 1
        %v350 = vsel %vm320, %v347, %v349
        %v351 = vrot.slane %v236, 1
        %v352 = vrot.slane %v237, 1
        %v353 = vsel %vm320, %v351, %v352
        %v354 = vrot.slane %v238, 1
        %v355 = vsel %vm320, %v352, %v354
        %v356 = vrot.slane %v239, 1
        %v357 = vrot.slane %v240, 1
        %v358 = vsel %vm320, %v356, %v357
        %v359 = vrot.slane %v241, 1
        %v360 = vsel %vm320, %v357, %v359
        %v361 = vrot.slane %v242, 1
        %v362 = vrot.slane %v243, 1
        %v363 = vsel %vm320, %v361, %v362
        %v364 = vrot.slane %v244, 1
        %v365 = vsel %vm320, %v362, %v364
        %v366 = vrot.slane %v245, 1
        %v367 = vrot.slane %v246, 1
        %v368 = vsel %vm320, %v366, %v367
        %v369 = vrot.slane %v247, 1
        %v370 = vsel %vm320, %v367, %v369
        %v371 = vrot.slane %v248, 1
        %v372 = vrot.slane %v249, 1
        %v373 = vsel %vm320, %v371, %v372
        %v374 = vrot.slane %v250, 1
        %v375 = vsel %vm320, %v372, %v374
        %v376 = vrot.slane %v251, 1
        %v377 = vrot.slane %v252, 1
        %v378 = vsel %vm320, %v376, %v377
        %v379 = vrot.slane %v253, 1
        %v380 = vsel %vm320, %v377, %v379
        %v381 = vrot.slane %v254, 1
        %v382 = vrot.slane %v255, 1
        %v383 = vsel %vm320, %v381, %v382
        %v384 = vrot.slane %v256, 1
        %v385 = vsel %vm320, %v382, %v384
        %v386 = vrot.slane %v257, 1
        %v387 = vrot.slane %v258, 1
        %v388 = vsel %vm320, %v386, %v387
        %v389 = vrot.slane %v259, 1
        %v390 = vsel %vm320, %v387, %v389
        %v391 = vrot.slane %v260, 1
        %v392 = vrot.slane %v261, 1
        %v393 = vsel %vm320, %v391, %v392
        %v394 = vrot.slane %v262, 1
        %v395 = vsel %vm320, %v392, %v394
        %v396 = vrot.slane %v263, 1
        %v397 = vrot.slane %v264, 1
        %v398 = vsel %vm320, %v396, %v397
        %v399 = vrot.slane %v265, 1
        %v400 = vsel %vm320, %v397, %v399
        %vm401 = vcmask 1045504
        %v402 = vrot.slane %v218, 2
        %v403 = vrot.slane %v219, 2
        %v404 = vsel %vm401, %v402, %v403
        %v405 = vrot.slane %v220, 2
        %v406 = vsel %vm401, %v403, %v405
        %v407 = vrot.slane %v221, 2
        %v408 = vrot.slane %v222, 2
        %v409 = vsel %vm401, %v407, %v408
        %v410 = vrot.slane %v223, 2
        %v411 = vsel %vm401, %v408, %v410
        %v412 = vrot.slane %v224, 2
        %v413 = vrot.slane %v225, 2
        %v414 = vsel %vm401, %v412, %v413
        %v415 = vrot.slane %v226, 2
        %v416 = vsel %vm401, %v413, %v415
        %v417 = vrot.slane %v227, 2
        %v418 = vrot.slane %v228, 2
        %v419 = vsel %vm401, %v417, %v418
        %v420 = vrot.slane %v229, 2
        %v421 = vsel %vm401, %v418, %v420
        %v422 = vrot.slane %v230, 2
        %v423 = vrot.slane %v231, 2
        %v424 = vsel %vm401, %v422, %v423
        %v425 = vrot.slane %v232, 2
        %v426 = vsel %vm401, %v423, %v425
        %v427 = vrot.slane %v233, 2
        %v428 = vrot.slane %v234, 2
        %v429 = vsel %vm401, %v427, %v428
        %v430 = vrot.slane %v235, 2
        %v431 = vsel %vm401, %v428, %v430
        %v432 = vrot.slane %v236, 2
        %v433 = vrot.slane %v237, 2
        %v434 = vsel %vm401, %v432, %v433
        %v435 = vrot.slane %v238, 2
        %v436 = vsel %vm401, %v433, %v435
        %v437 = vrot.slane %v239, 2
        %v438 = vrot.slane %v240, 2
        %v439 = vsel %vm401, %v437, %v438
        %v440 = vrot.slane %v241, 2
        %v441 = vsel %vm401, %v438, %v440
        %v442 = vrot.slane %v242, 2
        %v443 = vrot.slane %v243, 2
        %v444 = vsel %vm401, %v442, %v443
        %v445 = vrot.slane %v244, 2
        %v446 = vsel %vm401, %v443, %v445
        %v447 = vrot.slane %v245, 2
        %v448 = vrot.slane %v246, 2
        %v449 = vsel %vm401, %v447, %v448
        %v450 = vrot.slane %v247, 2
        %v451 = vsel %vm401, %v448, %v450
        %v452 = vrot.slane %v248, 2
        %v453 = vrot.slane %v249, 2
        %v454 = vsel %vm401, %v452, %v453
        %v455 = vrot.slane %v250, 2
        %v456 = vsel %vm401, %v453, %v455
        %v457 = vrot.slane %v251, 2
        %v458 = vrot.slane %v252, 2
        %v459 = vsel %vm401, %v457, %v458
        %v460 = vrot.slane %v253, 2
        %v461 = vsel %vm401, %v458, %v460
        %v462 = vrot.slane %v254, 2
        %v463 = vrot.slane %v255, 2
        %v464 = vsel %vm401, %v462, %v463
        %v465 = vrot.slane %v256, 2
        %v466 = vsel %vm401, %v463, %v465
        %v467 = vrot.slane %v257, 2
        %v468 = vrot.slane %v258, 2
        %v469 = vsel %vm401, %v467, %v468
        %v470 = vrot.slane %v259, 2
        %v471 = vsel %vm401, %v468, %v470
        %v472 = vrot.slane %v260, 2
        %v473 = vrot.slane %v261, 2
        %v474 = vsel %vm401, %v472, %v473
        %v475 = vrot.slane %v262, 2
        %v476 = vsel %vm401, %v473, %v475
        %v477 = vrot.slane %v263, 2
        %v478 = vrot.slane %v264, 2
        %v479 = vsel %vm401, %v477, %v478
        %v480 = vrot.slane %v265, 2
        %v481 = vsel %vm401, %v478, %v480
        %v485 = vrot.slane %v266, 1
        %v486 = vrot.slane %v267, 1
        %v487 = vsel %vm320, %v485, %v486
        %v488 = vrot.slane %v268, 1
        %v489 = vsel %vm320, %v486, %v488
        %v490 = vrot.slane %v266, 2
        %v491 = vrot.slane %v267, 2
        %v492 = vsel %vm401, %v490, %v491
        %v493 = vrot.slane %v268, 2
        %v494 = vsel %vm401, %v491, %v493
        %v498 = vrot.slane %v269, 1
        %v499 = vrot.slane %v270, 1
        %v500 = vsel %vm320, %v498, %v499
        %v501 = vrot.slane %v271, 1
        %v502 = vsel %vm320, %v499, %v501
        %v503 = vrot.slane %v269, 2
        %v504 = vrot.slane %v270, 2
        %v505 = vsel %vm401, %v503, %v504
        %v506 = vrot.slane %v271, 2
        %v507 = vsel %vm401, %v504, %v506
        %508 = vrot.lane.b32.xlu0 %v323, 4
        %v509 = vpop.permute.xlu0 %508
        %510 = vrot.lane.b32.xlu0 %v325, 4
        %v511 = vpop.permute.xlu0 %510
        %512 = vrot.lane.b32.xlu0 %v328, 4
        %v513 = vpop.permute.xlu0 %512
        %514 = vrot.lane.b32.xlu0 %v330, 4
        %v515 = vpop.permute.xlu0 %514
        %516 = vrot.lane.b32.xlu0 %v333, 4
        %v517 = vpop.permute.xlu0 %516
        %518 = vrot.lane.b32.xlu0 %v335, 4
        %v519 = vpop.permute.xlu0 %518
        %520 = vrot.lane.b32.xlu0 %v338, 4
        %v521 = vpop.permute.xlu0 %520
        %522 = vrot.lane.b32.xlu0 %v340, 4
        %v523 = vpop.permute.xlu0 %522
        %524 = vrot.lane.b32.xlu0 %v343, 4
        %v525 = vpop.permute.xlu0 %524
        %526 = vrot.lane.b32.xlu0 %v345, 4
        %v527 = vpop.permute.xlu0 %526
        %528 = vrot.lane.b32.xlu0 %v348, 4
        %v529 = vpop.permute.xlu0 %528
        %530 = vrot.lane.b32.xlu0 %v350, 4
        %v531 = vpop.permute.xlu0 %530
        %532 = vrot.lane.b32.xlu0 %v353, 4
        %v533 = vpop.permute.xlu0 %532
        %534 = vrot.lane.b32.xlu0 %v355, 4
        %v535 = vpop.permute.xlu0 %534
        %536 = vrot.lane.b32.xlu0 %v358, 4
        %v537 = vpop.permute.xlu0 %536
        %538 = vrot.lane.b32.xlu0 %v360, 4
        %v539 = vpop.permute.xlu0 %538
        %540 = vrot.lane.b32.xlu0 %v363, 4
        %v541 = vpop.permute.xlu0 %540
        %542 = vrot.lane.b32.xlu0 %v365, 4
        %v543 = vpop.permute.xlu0 %542
        %544 = vrot.lane.b32.xlu0 %v368, 4
        %v545 = vpop.permute.xlu0 %544
        %546 = vrot.lane.b32.xlu0 %v370, 4
        %v547 = vpop.permute.xlu0 %546
        %548 = vrot.lane.b32.xlu0 %v373, 4
        %v549 = vpop.permute.xlu0 %548
        %550 = vrot.lane.b32.xlu0 %v375, 4
        %v551 = vpop.permute.xlu0 %550
        %552 = vrot.lane.b32.xlu0 %v378, 4
        %v553 = vpop.permute.xlu0 %552
        %554 = vrot.lane.b32.xlu0 %v380, 4
        %v555 = vpop.permute.xlu0 %554
        %556 = vrot.lane.b32.xlu0 %v383, 4
        %v557 = vpop.permute.xlu0 %556
        %558 = vrot.lane.b32.xlu0 %v385, 4
        %v559 = vpop.permute.xlu0 %558
        %560 = vrot.lane.b32.xlu0 %v388, 4
        %v561 = vpop.permute.xlu0 %560
        %562 = vrot.lane.b32.xlu0 %v390, 4
        %v563 = vpop.permute.xlu0 %562
        %564 = vrot.lane.b32.xlu0 %v393, 4
        %v565 = vpop.permute.xlu0 %564
        %566 = vrot.lane.b32.xlu0 %v395, 4
        %v567 = vpop.permute.xlu0 %566
        %568 = vrot.lane.b32.xlu0 %v398, 4
        %v569 = vpop.permute.xlu0 %568
        %570 = vrot.lane.b32.xlu0 %v400, 4
        %v571 = vpop.permute.xlu0 %570
        %604 = vrot.lane.b32.xlu0 %v404, 8
        %v605 = vpop.permute.xlu0 %604
        %606 = vrot.lane.b32.xlu0 %v406, 8
        %v607 = vpop.permute.xlu0 %606
        %608 = vrot.lane.b32.xlu0 %v409, 8
        %v609 = vpop.permute.xlu0 %608
        %610 = vrot.lane.b32.xlu0 %v411, 8
        %v611 = vpop.permute.xlu0 %610
        %612 = vrot.lane.b32.xlu0 %v414, 8
        %v613 = vpop.permute.xlu0 %612
        %614 = vrot.lane.b32.xlu0 %v416, 8
        %v615 = vpop.permute.xlu0 %614
        %616 = vrot.lane.b32.xlu0 %v419, 8
        %v617 = vpop.permute.xlu0 %616
        %618 = vrot.lane.b32.xlu0 %v421, 8
        %v619 = vpop.permute.xlu0 %618
        %620 = vrot.lane.b32.xlu0 %v424, 8
        %v621 = vpop.permute.xlu0 %620
        %622 = vrot.lane.b32.xlu0 %v426, 8
        %v623 = vpop.permute.xlu0 %622
        %624 = vrot.lane.b32.xlu0 %v429, 8
        %v625 = vpop.permute.xlu0 %624
        %626 = vrot.lane.b32.xlu0 %v431, 8
        %v627 = vpop.permute.xlu0 %626
        %628 = vrot.lane.b32.xlu0 %v434, 8
        %v629 = vpop.permute.xlu0 %628
        %630 = vrot.lane.b32.xlu0 %v436, 8
        %v631 = vpop.permute.xlu0 %630
        %632 = vrot.lane.b32.xlu0 %v439, 8
        %v633 = vpop.permute.xlu0 %632
        %634 = vrot.lane.b32.xlu0 %v441, 8
        %v635 = vpop.permute.xlu0 %634
        %636 = vrot.lane.b32.xlu0 %v444, 8
        %v637 = vpop.permute.xlu0 %636
        %638 = vrot.lane.b32.xlu0 %v446, 8
        %v639 = vpop.permute.xlu0 %638
        %640 = vrot.lane.b32.xlu0 %v449, 8
        %v641 = vpop.permute.xlu0 %640
        %642 = vrot.lane.b32.xlu0 %v451, 8
        %v643 = vpop.permute.xlu0 %642
        %644 = vrot.lane.b32.xlu0 %v454, 8
        %v645 = vpop.permute.xlu0 %644
        %646 = vrot.lane.b32.xlu0 %v456, 8
        %v647 = vpop.permute.xlu0 %646
        %648 = vrot.lane.b32.xlu0 %v459, 8
        %v649 = vpop.permute.xlu0 %648
        %650 = vrot.lane.b32.xlu0 %v461, 8
        %v651 = vpop.permute.xlu0 %650
        %652 = vrot.lane.b32.xlu0 %v464, 8
        %v653 = vpop.permute.xlu0 %652
        %654 = vrot.lane.b32.xlu0 %v466, 8
        %v655 = vpop.permute.xlu0 %654
        %656 = vrot.lane.b32.xlu0 %v469, 8
        %v657 = vpop.permute.xlu0 %656
        %658 = vrot.lane.b32.xlu0 %v471, 8
        %v659 = vpop.permute.xlu0 %658
        %660 = vrot.lane.b32.xlu0 %v474, 8
        %v661 = vpop.permute.xlu0 %660
        %662 = vrot.lane.b32.xlu0 %v476, 8
        %v663 = vpop.permute.xlu0 %662
        %664 = vrot.lane.b32.xlu0 %v479, 8
        %v665 = vpop.permute.xlu0 %664
        %666 = vrot.lane.b32.xlu0 %v481, 8
        %v667 = vpop.permute.xlu0 %666
        %700 = vrot.lane.b32.xlu0 %v221, 12
        %v701 = vpop.permute.xlu0 %700
        %702 = vrot.lane.b32.xlu0 %v222, 12
        %v703 = vpop.permute.xlu0 %702
        %704 = vrot.lane.b32.xlu0 %v224, 12
        %v705 = vpop.permute.xlu0 %704
        %706 = vrot.lane.b32.xlu0 %v225, 12
        %v707 = vpop.permute.xlu0 %706
        %708 = vrot.lane.b32.xlu0 %v227, 12
        %v709 = vpop.permute.xlu0 %708
        %710 = vrot.lane.b32.xlu0 %v228, 12
        %v711 = vpop.permute.xlu0 %710
        %712 = vrot.lane.b32.xlu0 %v230, 12
        %v713 = vpop.permute.xlu0 %712
        %714 = vrot.lane.b32.xlu0 %v231, 12
        %v715 = vpop.permute.xlu0 %714
        %716 = vrot.lane.b32.xlu0 %v233, 12
        %v717 = vpop.permute.xlu0 %716
        %718 = vrot.lane.b32.xlu0 %v234, 12
        %v719 = vpop.permute.xlu0 %718
        %720 = vrot.lane.b32.xlu0 %v236, 12
        %v721 = vpop.permute.xlu0 %720
        %722 = vrot.lane.b32.xlu0 %v237, 12
        %v723 = vpop.permute.xlu0 %722
        %724 = vrot.lane.b32.xlu0 %v239, 12
        %v725 = vpop.permute.xlu0 %724
        %726 = vrot.lane.b32.xlu0 %v240, 12
        %v727 = vpop.permute.xlu0 %726
        %728 = vrot.lane.b32.xlu0 %v242, 12
        %v729 = vpop.permute.xlu0 %728
        %730 = vrot.lane.b32.xlu0 %v243, 12
        %v731 = vpop.permute.xlu0 %730
        %732 = vrot.lane.b32.xlu0 %v245, 12
        %v733 = vpop.permute.xlu0 %732
        %734 = vrot.lane.b32.xlu0 %v246, 12
        %v735 = vpop.permute.xlu0 %734
        %736 = vrot.lane.b32.xlu0 %v248, 12
        %v737 = vpop.permute.xlu0 %736
        %738 = vrot.lane.b32.xlu0 %v249, 12
        %v739 = vpop.permute.xlu0 %738
        %740 = vrot.lane.b32.xlu0 %v251, 12
        %v741 = vpop.permute.xlu0 %740
        %742 = vrot.lane.b32.xlu0 %v252, 12
        %v743 = vpop.permute.xlu0 %742
        %744 = vrot.lane.b32.xlu0 %v254, 12
        %v745 = vpop.permute.xlu0 %744
        %746 = vrot.lane.b32.xlu0 %v255, 12
        %v747 = vpop.permute.xlu0 %746
        %748 = vrot.lane.b32.xlu0 %v257, 12
        %v749 = vpop.permute.xlu0 %748
        %750 = vrot.lane.b32.xlu0 %v258, 12
        %v751 = vpop.permute.xlu0 %750
        %752 = vrot.lane.b32.xlu0 %v260, 12
        %v753 = vpop.permute.xlu0 %752
        %754 = vrot.lane.b32.xlu0 %v261, 12
        %v755 = vpop.permute.xlu0 %754
        %756 = vrot.lane.b32.xlu0 %v263, 12
        %v757 = vpop.permute.xlu0 %756
        %758 = vrot.lane.b32.xlu0 %v264, 12
        %v759 = vpop.permute.xlu0 %758
        %760 = vrot.lane.b32.xlu0 %v266, 12
        %v761 = vpop.permute.xlu0 %760
        %762 = vrot.lane.b32.xlu0 %v267, 12
        %v763 = vpop.permute.xlu0 %762
        %796 = vrot.lane.b32.xlu0 %v328, 16
        %v797 = vpop.permute.xlu0 %796
        %798 = vrot.lane.b32.xlu0 %v330, 16
        %v799 = vpop.permute.xlu0 %798
        %800 = vrot.lane.b32.xlu0 %v333, 16
        %v801 = vpop.permute.xlu0 %800
        %802 = vrot.lane.b32.xlu0 %v335, 16
        %v803 = vpop.permute.xlu0 %802
        %804 = vrot.lane.b32.xlu0 %v338, 16
        %v805 = vpop.permute.xlu0 %804
        %806 = vrot.lane.b32.xlu0 %v340, 16
        %v807 = vpop.permute.xlu0 %806
        %808 = vrot.lane.b32.xlu0 %v343, 16
        %v809 = vpop.permute.xlu0 %808
        %810 = vrot.lane.b32.xlu0 %v345, 16
        %v811 = vpop.permute.xlu0 %810
        %812 = vrot.lane.b32.xlu0 %v348, 16
        %v813 = vpop.permute.xlu0 %812
        %814 = vrot.lane.b32.xlu0 %v350, 16
        %v815 = vpop.permute.xlu0 %814
        %816 = vrot.lane.b32.xlu0 %v353, 16
        %v817 = vpop.permute.xlu0 %816
        %818 = vrot.lane.b32.xlu0 %v355, 16
        %v819 = vpop.permute.xlu0 %818
        %820 = vrot.lane.b32.xlu0 %v358, 16
        %v821 = vpop.permute.xlu0 %820
        %822 = vrot.lane.b32.xlu0 %v360, 16
        %v823 = vpop.permute.xlu0 %822
        %824 = vrot.lane.b32.xlu0 %v363, 16
        %v825 = vpop.permute.xlu0 %824
        %826 = vrot.lane.b32.xlu0 %v365, 16
        %v827 = vpop.permute.xlu0 %826
        %828 = vrot.lane.b32.xlu0 %v368, 16
        %v829 = vpop.permute.xlu0 %828
        %830 = vrot.lane.b32.xlu0 %v370, 16
        %v831 = vpop.permute.xlu0 %830
        %832 = vrot.lane.b32.xlu0 %v373, 16
        %v833 = vpop.permute.xlu0 %832
        %834 = vrot.lane.b32.xlu0 %v375, 16
        %v835 = vpop.permute.xlu0 %834
        %836 = vrot.lane.b32.xlu0 %v378, 16
        %v837 = vpop.permute.xlu0 %836
        %838 = vrot.lane.b32.xlu0 %v380, 16
        %v839 = vpop.permute.xlu0 %838
        %840 = vrot.lane.b32.xlu0 %v383, 16
        %v841 = vpop.permute.xlu0 %840
        %842 = vrot.lane.b32.xlu0 %v385, 16
        %v843 = vpop.permute.xlu0 %842
        %844 = vrot.lane.b32.xlu0 %v388, 16
        %v845 = vpop.permute.xlu0 %844
        %846 = vrot.lane.b32.xlu0 %v390, 16
        %v847 = vpop.permute.xlu0 %846
        %848 = vrot.lane.b32.xlu0 %v393, 16
        %v849 = vpop.permute.xlu0 %848
        %850 = vrot.lane.b32.xlu0 %v395, 16
        %v851 = vpop.permute.xlu0 %850
        %852 = vrot.lane.b32.xlu0 %v398, 16
        %v853 = vpop.permute.xlu0 %852
        %854 = vrot.lane.b32.xlu0 %v400, 16
        %v855 = vpop.permute.xlu0 %854
        %856 = vrot.lane.b32.xlu0 %v487, 16
        %v857 = vpop.permute.xlu0 %856
        %858 = vrot.lane.b32.xlu0 %v489, 16
        %v859 = vpop.permute.xlu0 %858
        %892 = vrot.lane.b32.xlu0 %v409, 20
        %v893 = vpop.permute.xlu0 %892
        %894 = vrot.lane.b32.xlu0 %v411, 20
        %v895 = vpop.permute.xlu0 %894
        %896 = vrot.lane.b32.xlu0 %v414, 20
        %v897 = vpop.permute.xlu0 %896
        %898 = vrot.lane.b32.xlu0 %v416, 20
        %v899 = vpop.permute.xlu0 %898
        %900 = vrot.lane.b32.xlu0 %v419, 20
        %v901 = vpop.permute.xlu0 %900
        %902 = vrot.lane.b32.xlu0 %v421, 20
        %v903 = vpop.permute.xlu0 %902
        %904 = vrot.lane.b32.xlu0 %v424, 20
        %v905 = vpop.permute.xlu0 %904
        %906 = vrot.lane.b32.xlu0 %v426, 20
        %v907 = vpop.permute.xlu0 %906
        %908 = vrot.lane.b32.xlu0 %v429, 20
        %v909 = vpop.permute.xlu0 %908
        %910 = vrot.lane.b32.xlu0 %v431, 20
        %v911 = vpop.permute.xlu0 %910
        %912 = vrot.lane.b32.xlu0 %v434, 20
        %v913 = vpop.permute.xlu0 %912
        %914 = vrot.lane.b32.xlu0 %v436, 20
        %v915 = vpop.permute.xlu0 %914
        %916 = vrot.lane.b32.xlu0 %v439, 20
        %v917 = vpop.permute.xlu0 %916
        %918 = vrot.lane.b32.xlu0 %v441, 20
        %v919 = vpop.permute.xlu0 %918
        %920 = vrot.lane.b32.xlu0 %v444, 20
        %v921 = vpop.permute.xlu0 %920
        %922 = vrot.lane.b32.xlu0 %v446, 20
        %v923 = vpop.permute.xlu0 %922
        %924 = vrot.lane.b32.xlu0 %v449, 20
        %v925 = vpop.permute.xlu0 %924
        %926 = vrot.lane.b32.xlu0 %v451, 20
        %v927 = vpop.permute.xlu0 %926
        %928 = vrot.lane.b32.xlu0 %v454, 20
        %v929 = vpop.permute.xlu0 %928
        %930 = vrot.lane.b32.xlu0 %v456, 20
        %v931 = vpop.permute.xlu0 %930
        %932 = vrot.lane.b32.xlu0 %v459, 20
        %v933 = vpop.permute.xlu0 %932
        %934 = vrot.lane.b32.xlu0 %v461, 20
        %v935 = vpop.permute.xlu0 %934
        %936 = vrot.lane.b32.xlu0 %v464, 20
        %v937 = vpop.permute.xlu0 %936
        %938 = vrot.lane.b32.xlu0 %v466, 20
        %v939 = vpop.permute.xlu0 %938
        %940 = vrot.lane.b32.xlu0 %v469, 20
        %v941 = vpop.permute.xlu0 %940
        %942 = vrot.lane.b32.xlu0 %v471, 20
        %v943 = vpop.permute.xlu0 %942
        %944 = vrot.lane.b32.xlu0 %v474, 20
        %v945 = vpop.permute.xlu0 %944
        %946 = vrot.lane.b32.xlu0 %v476, 20
        %v947 = vpop.permute.xlu0 %946
        %948 = vrot.lane.b32.xlu0 %v479, 20
        %v949 = vpop.permute.xlu0 %948
        %950 = vrot.lane.b32.xlu0 %v481, 20
        %v951 = vpop.permute.xlu0 %950
        %952 = vrot.lane.b32.xlu0 %v492, 20
        %v953 = vpop.permute.xlu0 %952
        %954 = vrot.lane.b32.xlu0 %v494, 20
        %v955 = vpop.permute.xlu0 %954
        %988 = vrot.lane.b32.xlu0 %v224, 24
        %v989 = vpop.permute.xlu0 %988
        %990 = vrot.lane.b32.xlu0 %v225, 24
        %v991 = vpop.permute.xlu0 %990
        %992 = vrot.lane.b32.xlu0 %v227, 24
        %v993 = vpop.permute.xlu0 %992
        %994 = vrot.lane.b32.xlu0 %v228, 24
        %v995 = vpop.permute.xlu0 %994
        %996 = vrot.lane.b32.xlu0 %v230, 24
        %v997 = vpop.permute.xlu0 %996
        %998 = vrot.lane.b32.xlu0 %v231, 24
        %v999 = vpop.permute.xlu0 %998
        %1000 = vrot.lane.b32.xlu0 %v233, 24
        %v1001 = vpop.permute.xlu0 %1000
        %1002 = vrot.lane.b32.xlu0 %v234, 24
        %v1003 = vpop.permute.xlu0 %1002
        %1004 = vrot.lane.b32.xlu0 %v236, 24
        %v1005 = vpop.permute.xlu0 %1004
        %1006 = vrot.lane.b32.xlu0 %v237, 24
        %v1007 = vpop.permute.xlu0 %1006
        %1008 = vrot.lane.b32.xlu0 %v239, 24
        %v1009 = vpop.permute.xlu0 %1008
        %1010 = vrot.lane.b32.xlu0 %v240, 24
        %v1011 = vpop.permute.xlu0 %1010
        %1012 = vrot.lane.b32.xlu0 %v242, 24
        %v1013 = vpop.permute.xlu0 %1012
        %1014 = vrot.lane.b32.xlu0 %v243, 24
        %v1015 = vpop.permute.xlu0 %1014
        %1016 = vrot.lane.b32.xlu0 %v245, 24
        %v1017 = vpop.permute.xlu0 %1016
        %1018 = vrot.lane.b32.xlu0 %v246, 24
        %v1019 = vpop.permute.xlu0 %1018
        %1020 = vrot.lane.b32.xlu0 %v248, 24
        %v1021 = vpop.permute.xlu0 %1020
        %1022 = vrot.lane.b32.xlu0 %v249, 24
        %v1023 = vpop.permute.xlu0 %1022
        %1024 = vrot.lane.b32.xlu0 %v251, 24
        %v1025 = vpop.permute.xlu0 %1024
        %1026 = vrot.lane.b32.xlu0 %v252, 24
        %v1027 = vpop.permute.xlu0 %1026
        %1028 = vrot.lane.b32.xlu0 %v254, 24
        %v1029 = vpop.permute.xlu0 %1028
        %1030 = vrot.lane.b32.xlu0 %v255, 24
        %v1031 = vpop.permute.xlu0 %1030
        %1032 = vrot.lane.b32.xlu0 %v257, 24
        %v1033 = vpop.permute.xlu0 %1032
        %1034 = vrot.lane.b32.xlu0 %v258, 24
        %v1035 = vpop.permute.xlu0 %1034
        %1036 = vrot.lane.b32.xlu0 %v260, 24
        %v1037 = vpop.permute.xlu0 %1036
        %1038 = vrot.lane.b32.xlu0 %v261, 24
        %v1039 = vpop.permute.xlu0 %1038
        %1040 = vrot.lane.b32.xlu0 %v263, 24
        %v1041 = vpop.permute.xlu0 %1040
        %1042 = vrot.lane.b32.xlu0 %v264, 24
        %v1043 = vpop.permute.xlu0 %1042
        %1044 = vrot.lane.b32.xlu0 %v266, 24
        %v1045 = vpop.permute.xlu0 %1044
        %1046 = vrot.lane.b32.xlu0 %v267, 24
        %v1047 = vpop.permute.xlu0 %1046
        %1048 = vrot.lane.b32.xlu0 %v269, 24
        %v1049 = vpop.permute.xlu0 %1048
        %1050 = vrot.lane.b32.xlu0 %v270, 24
        %v1051 = vpop.permute.xlu0 %1050
        %1084 = vrot.lane.b32.xlu0 %v333, 28
        %v1085 = vpop.permute.xlu0 %1084
        %1086 = vrot.lane.b32.xlu0 %v335, 28
        %v1087 = vpop.permute.xlu0 %1086
        %1088 = vrot.lane.b32.xlu0 %v338, 28
        %v1089 = vpop.permute.xlu0 %1088
        %1090 = vrot.lane.b32.xlu0 %v340, 28
        %v1091 = vpop.permute.xlu0 %1090
        %1092 = vrot.lane.b32.xlu0 %v343, 28
        %v1093 = vpop.permute.xlu0 %1092
        %1094 = vrot.lane.b32.xlu0 %v345, 28
        %v1095 = vpop.permute.xlu0 %1094
        %1096 = vrot.lane.b32.xlu0 %v348, 28
        %v1097 = vpop.permute.xlu0 %1096
        %1098 = vrot.lane.b32.xlu0 %v350, 28
        %v1099 = vpop.permute.xlu0 %1098
        %1100 = vrot.lane.b32.xlu0 %v353, 28
        %v1101 = vpop.permute.xlu0 %1100
        %1102 = vrot.lane.b32.xlu0 %v355, 28
        %v1103 = vpop.permute.xlu0 %1102
        %1104 = vrot.lane.b32.xlu0 %v358, 28
        %v1105 = vpop.permute.xlu0 %1104
        %1106 = vrot.lane.b32.xlu0 %v360, 28
        %v1107 = vpop.permute.xlu0 %1106
        %1108 = vrot.lane.b32.xlu0 %v363, 28
        %v1109 = vpop.permute.xlu0 %1108
        %1110 = vrot.lane.b32.xlu0 %v365, 28
        %v1111 = vpop.permute.xlu0 %1110
        %1112 = vrot.lane.b32.xlu0 %v368, 28
        %v1113 = vpop.permute.xlu0 %1112
        %1114 = vrot.lane.b32.xlu0 %v370, 28
        %v1115 = vpop.permute.xlu0 %1114
        %1116 = vrot.lane.b32.xlu0 %v373, 28
        %v1117 = vpop.permute.xlu0 %1116
        %1118 = vrot.lane.b32.xlu0 %v375, 28
        %v1119 = vpop.permute.xlu0 %1118
        %1120 = vrot.lane.b32.xlu0 %v378, 28
        %v1121 = vpop.permute.xlu0 %1120
        %1122 = vrot.lane.b32.xlu0 %v380, 28
        %v1123 = vpop.permute.xlu0 %1122
        %1124 = vrot.lane.b32.xlu0 %v383, 28
        %v1125 = vpop.permute.xlu0 %1124
        %1126 = vrot.lane.b32.xlu0 %v385, 28
        %v1127 = vpop.permute.xlu0 %1126
        %1128 = vrot.lane.b32.xlu0 %v388, 28
        %v1129 = vpop.permute.xlu0 %1128
        %1130 = vrot.lane.b32.xlu0 %v390, 28
        %v1131 = vpop.permute.xlu0 %1130
        %1132 = vrot.lane.b32.xlu0 %v393, 28
        %v1133 = vpop.permute.xlu0 %1132
        %1134 = vrot.lane.b32.xlu0 %v395, 28
        %v1135 = vpop.permute.xlu0 %1134
        %1136 = vrot.lane.b32.xlu0 %v398, 28
        %v1137 = vpop.permute.xlu0 %1136
        %1138 = vrot.lane.b32.xlu0 %v400, 28
        %v1139 = vpop.permute.xlu0 %1138
        %1140 = vrot.lane.b32.xlu0 %v487, 28
        %v1141 = vpop.permute.xlu0 %1140
        %1142 = vrot.lane.b32.xlu0 %v489, 28
        %v1143 = vpop.permute.xlu0 %1142
        %1144 = vrot.lane.b32.xlu0 %v500, 28
        %v1145 = vpop.permute.xlu0 %1144
        %1146 = vrot.lane.b32.xlu0 %v502, 28
        %v1147 = vpop.permute.xlu0 %1146
        %1180 = vrot.lane.b32.xlu0 %v414, 32
        %v1181 = vpop.permute.xlu0 %1180
        %1182 = vrot.lane.b32.xlu0 %v416, 32
        %v1183 = vpop.permute.xlu0 %1182
        %1184 = vrot.lane.b32.xlu0 %v419, 32
        %v1185 = vpop.permute.xlu0 %1184
        %1186 = vrot.lane.b32.xlu0 %v421, 32
        %v1187 = vpop.permute.xlu0 %1186
        %1188 = vrot.lane.b32.xlu0 %v424, 32
        %v1189 = vpop.permute.xlu0 %1188
        %1190 = vrot.lane.b32.xlu0 %v426, 32
        %v1191 = vpop.permute.xlu0 %1190
        %1192 = vrot.lane.b32.xlu0 %v429, 32
        %v1193 = vpop.permute.xlu0 %1192
        %1194 = vrot.lane.b32.xlu0 %v431, 32
        %v1195 = vpop.permute.xlu0 %1194
        %1196 = vrot.lane.b32.xlu0 %v434, 32
        %v1197 = vpop.permute.xlu0 %1196
        %1198 = vrot.lane.b32.xlu0 %v436, 32
        %v1199 = vpop.permute.xlu0 %1198
        %1200 = vrot.lane.b32.xlu0 %v439, 32
        %v1201 = vpop.permute.xlu0 %1200
        %1202 = vrot.lane.b32.xlu0 %v441, 32
        %v1203 = vpop.permute.xlu0 %1202
        %1204 = vrot.lane.b32.xlu0 %v444, 32
        %v1205 = vpop.permute.xlu0 %1204
        %1206 = vrot.lane.b32.xlu0 %v446, 32
        %v1207 = vpop.permute.xlu0 %1206
        %1208 = vrot.lane.b32.xlu0 %v449, 32
        %v1209 = vpop.permute.xlu0 %1208
        %1210 = vrot.lane.b32.xlu0 %v451, 32
        %v1211 = vpop.permute.xlu0 %1210
        %1212 = vrot.lane.b32.xlu0 %v454, 32
        %v1213 = vpop.permute.xlu0 %1212
        %1214 = vrot.lane.b32.xlu0 %v456, 32
        %v1215 = vpop.permute.xlu0 %1214
        %1216 = vrot.lane.b32.xlu0 %v459, 32
        %v1217 = vpop.permute.xlu0 %1216
        %1218 = vrot.lane.b32.xlu0 %v461, 32
        %v1219 = vpop.permute.xlu0 %1218
        %1220 = vrot.lane.b32.xlu0 %v464, 32
        %v1221 = vpop.permute.xlu0 %1220
        %1222 = vrot.lane.b32.xlu0 %v466, 32
        %v1223 = vpop.permute.xlu0 %1222
        %1224 = vrot.lane.b32.xlu0 %v469, 32
        %v1225 = vpop.permute.xlu0 %1224
        %1226 = vrot.lane.b32.xlu0 %v471, 32
        %v1227 = vpop.permute.xlu0 %1226
        %1228 = vrot.lane.b32.xlu0 %v474, 32
        %v1229 = vpop.permute.xlu0 %1228
        %1230 = vrot.lane.b32.xlu0 %v476, 32
        %v1231 = vpop.permute.xlu0 %1230
        %1232 = vrot.lane.b32.xlu0 %v479, 32
        %v1233 = vpop.permute.xlu0 %1232
        %1234 = vrot.lane.b32.xlu0 %v481, 32
        %v1235 = vpop.permute.xlu0 %1234
        %1236 = vrot.lane.b32.xlu0 %v492, 32
        %v1237 = vpop.permute.xlu0 %1236
        %1238 = vrot.lane.b32.xlu0 %v494, 32
        %v1239 = vpop.permute.xlu0 %1238
        %1240 = vrot.lane.b32.xlu0 %v505, 32
        %v1241 = vpop.permute.xlu0 %1240
        %1242 = vrot.lane.b32.xlu0 %v507, 32
        %v1243 = vpop.permute.xlu0 %1242
        %vm1276 = vcmask 31744
        %v1277 = vsel %vm1276, %v218, %v509
        %v1278 = vsel %vm1276, %v219, %v511
        %v1279 = vsel %vm1276, %v221, %v513
        %v1280 = vsel %vm1276, %v222, %v515
        %v1281 = vsel %vm1276, %v224, %v517
        %v1282 = vsel %vm1276, %v225, %v519
        %v1283 = vsel %vm1276, %v227, %v521
        %v1284 = vsel %vm1276, %v228, %v523
        %v1285 = vsel %vm1276, %v230, %v525
        %v1286 = vsel %vm1276, %v231, %v527
        %v1287 = vsel %vm1276, %v233, %v529
        %v1288 = vsel %vm1276, %v234, %v531
        %v1289 = vsel %vm1276, %v236, %v533
        %v1290 = vsel %vm1276, %v237, %v535
        %v1291 = vsel %vm1276, %v239, %v537
        %v1292 = vsel %vm1276, %v240, %v539
        %v1293 = vsel %vm1276, %v242, %v541
        %v1294 = vsel %vm1276, %v243, %v543
        %v1295 = vsel %vm1276, %v245, %v545
        %v1296 = vsel %vm1276, %v246, %v547
        %v1297 = vsel %vm1276, %v248, %v549
        %v1298 = vsel %vm1276, %v249, %v551
        %v1299 = vsel %vm1276, %v251, %v553
        %v1300 = vsel %vm1276, %v252, %v555
        %v1301 = vsel %vm1276, %v254, %v557
        %v1302 = vsel %vm1276, %v255, %v559
        %v1303 = vsel %vm1276, %v257, %v561
        %v1304 = vsel %vm1276, %v258, %v563
        %v1305 = vsel %vm1276, %v260, %v565
        %v1306 = vsel %vm1276, %v261, %v567
        %v1307 = vsel %vm1276, %v263, %v569
        %v1308 = vsel %vm1276, %v264, %v571
        %vm1309 = vcmask 64512
        %v1310 = vsel %vm1309, %v1277, %v605
        %v1311 = vsel %vm1309, %v1278, %v607
        %v1312 = vsel %vm1309, %v1279, %v609
        %v1313 = vsel %vm1309, %v1280, %v611
        %v1314 = vsel %vm1309, %v1281, %v613
        %v1315 = vsel %vm1309, %v1282, %v615
        %v1316 = vsel %vm1309, %v1283, %v617
        %v1317 = vsel %vm1309, %v1284, %v619
        %v1318 = vsel %vm1309, %v1285, %v621
        %v1319 = vsel %vm1309, %v1286, %v623
        %v1320 = vsel %vm1309, %v1287, %v625
        %v1321 = vsel %vm1309, %v1288, %v627
        %v1322 = vsel %vm1309, %v1289, %v629
        %v1323 = vsel %vm1309, %v1290, %v631
        %v1324 = vsel %vm1309, %v1291, %v633
        %v1325 = vsel %vm1309, %v1292, %v635
        %v1326 = vsel %vm1309, %v1293, %v637
        %v1327 = vsel %vm1309, %v1294, %v639
        %v1328 = vsel %vm1309, %v1295, %v641
        %v1329 = vsel %vm1309, %v1296, %v643
        %v1330 = vsel %vm1309, %v1297, %v645
        %v1331 = vsel %vm1309, %v1298, %v647
        %v1332 = vsel %vm1309, %v1299, %v649
        %v1333 = vsel %vm1309, %v1300, %v651
        %v1334 = vsel %vm1309, %v1301, %v653
        %v1335 = vsel %vm1309, %v1302, %v655
        %v1336 = vsel %vm1309, %v1303, %v657
        %v1337 = vsel %vm1309, %v1304, %v659
        %v1338 = vsel %vm1309, %v1305, %v661
        %v1339 = vsel %vm1309, %v1306, %v663
        %v1340 = vsel %vm1309, %v1307, %v665
        %v1341 = vsel %vm1309, %v1308, %v667
        %vm1342 = vcmask 97280
        %v1343 = vsel %vm1342, %v1310, %v701
        %v1344 = vsel %vm1342, %v1311, %v703
        %v1345 = vsel %vm1342, %v1312, %v705
        %v1346 = vsel %vm1342, %v1313, %v707
        %v1347 = vsel %vm1342, %v1314, %v709
        %v1348 = vsel %vm1342, %v1315, %v711
        %v1349 = vsel %vm1342, %v1316, %v713
        %v1350 = vsel %vm1342, %v1317, %v715
        %v1351 = vsel %vm1342, %v1318, %v717
        %v1352 = vsel %vm1342, %v1319, %v719
        %v1353 = vsel %vm1342, %v1320, %v721
        %v1354 = vsel %vm1342, %v1321, %v723
        %v1355 = vsel %vm1342, %v1322, %v725
        %v1356 = vsel %vm1342, %v1323, %v727
        %v1357 = vsel %vm1342, %v1324, %v729
        %v1358 = vsel %vm1342, %v1325, %v731
        %v1359 = vsel %vm1342, %v1326, %v733
        %v1360 = vsel %vm1342, %v1327, %v735
        %v1361 = vsel %vm1342, %v1328, %v737
        %v1362 = vsel %vm1342, %v1329, %v739
        %v1363 = vsel %vm1342, %v1330, %v741
        %v1364 = vsel %vm1342, %v1331, %v743
        %v1365 = vsel %vm1342, %v1332, %v745
        %v1366 = vsel %vm1342, %v1333, %v747
        %v1367 = vsel %vm1342, %v1334, %v749
        %v1368 = vsel %vm1342, %v1335, %v751
        %v1369 = vsel %vm1342, %v1336, %v753
        %v1370 = vsel %vm1342, %v1337, %v755
        %v1371 = vsel %vm1342, %v1338, %v757
        %v1372 = vsel %vm1342, %v1339, %v759
        %v1373 = vsel %vm1342, %v1340, %v761
        %v1374 = vsel %vm1342, %v1341, %v763
        %vm1375 = vcmask 130048
        %v1376 = vsel %vm1375, %v1343, %v797
        %v1377 = vsel %vm1375, %v1344, %v799
        %v1378 = vsel %vm1375, %v1345, %v801
        %v1379 = vsel %vm1375, %v1346, %v803
        %v1380 = vsel %vm1375, %v1347, %v805
        %v1381 = vsel %vm1375, %v1348, %v807
        %v1382 = vsel %vm1375, %v1349, %v809
        %v1383 = vsel %vm1375, %v1350, %v811
        %v1384 = vsel %vm1375, %v1351, %v813
        %v1385 = vsel %vm1375, %v1352, %v815
        %v1386 = vsel %vm1375, %v1353, %v817
        %v1387 = vsel %vm1375, %v1354, %v819
        %v1388 = vsel %vm1375, %v1355, %v821
        %v1389 = vsel %vm1375, %v1356, %v823
        %v1390 = vsel %vm1375, %v1357, %v825
        %v1391 = vsel %vm1375, %v1358, %v827
        %v1392 = vsel %vm1375, %v1359, %v829
        %v1393 = vsel %vm1375, %v1360, %v831
        %v1394 = vsel %vm1375, %v1361, %v833
        %v1395 = vsel %vm1375, %v1362, %v835
        %v1396 = vsel %vm1375, %v1363, %v837
        %v1397 = vsel %vm1375, %v1364, %v839
        %v1398 = vsel %vm1375, %v1365, %v841
        %v1399 = vsel %vm1375, %v1366, %v843
        %v1400 = vsel %vm1375, %v1367, %v845
        %v1401 = vsel %vm1375, %v1368, %v847
        %v1402 = vsel %vm1375, %v1369, %v849
        %v1403 = vsel %vm1375, %v1370, %v851
        %v1404 = vsel %vm1375, %v1371, %v853
        %v1405 = vsel %vm1375, %v1372, %v855
        %v1406 = vsel %vm1375, %v1373, %v857
        %v1407 = vsel %vm1375, %v1374, %v859
        %vm1408 = vcmask 162816
        %v1409 = vsel %vm1408, %v1376, %v893
        %v1410 = vsel %vm1408, %v1377, %v895
        %v1411 = vsel %vm1408, %v1378, %v897
        %v1412 = vsel %vm1408, %v1379, %v899
        %v1413 = vsel %vm1408, %v1380, %v901
        %v1414 = vsel %vm1408, %v1381, %v903
        %v1415 = vsel %vm1408, %v1382, %v905
        %v1416 = vsel %vm1408, %v1383, %v907
        %v1417 = vsel %vm1408, %v1384, %v909
        %v1418 = vsel %vm1408, %v1385, %v911
        %v1419 = vsel %vm1408, %v1386, %v913
        %v1420 = vsel %vm1408, %v1387, %v915
        %v1421 = vsel %vm1408, %v1388, %v917
        %v1422 = vsel %vm1408, %v1389, %v919
        %v1423 = vsel %vm1408, %v1390, %v921
        %v1424 = vsel %vm1408, %v1391, %v923
        %v1425 = vsel %vm1408, %v1392, %v925
        %v1426 = vsel %vm1408, %v1393, %v927
        %v1427 = vsel %vm1408, %v1394, %v929
        %v1428 = vsel %vm1408, %v1395, %v931
        %v1429 = vsel %vm1408, %v1396, %v933
        %v1430 = vsel %vm1408, %v1397, %v935
        %v1431 = vsel %vm1408, %v1398, %v937
        %v1432 = vsel %vm1408, %v1399, %v939
        %v1433 = vsel %vm1408, %v1400, %v941
        %v1434 = vsel %vm1408, %v1401, %v943
        %v1435 = vsel %vm1408, %v1402, %v945
        %v1436 = vsel %vm1408, %v1403, %v947
        %v1437 = vsel %vm1408, %v1404, %v949
        %v1438 = vsel %vm1408, %v1405, %v951
        %v1439 = vsel %vm1408, %v1406, %v953
        %v1440 = vsel %vm1408, %v1407, %v955
        %vm1441 = vcmask 195584
        %v1442 = vsel %vm1441, %v1409, %v989
        %v1443 = vsel %vm1441, %v1410, %v991
        %v1444 = vsel %vm1441, %v1411, %v993
        %v1445 = vsel %vm1441, %v1412, %v995
        %v1446 = vsel %vm1441, %v1413, %v997
        %v1447 = vsel %vm1441, %v1414, %v999
        %v1448 = vsel %vm1441, %v1415, %v1001
        %v1449 = vsel %vm1441, %v1416, %v1003
        %v1450 = vsel %vm1441, %v1417, %v1005
        %v1451 = vsel %vm1441, %v1418, %v1007
        %v1452 = vsel %vm1441, %v1419, %v1009
        %v1453 = vsel %vm1441, %v1420, %v1011
        %v1454 = vsel %vm1441, %v1421, %v1013
        %v1455 = vsel %vm1441, %v1422, %v1015
        %v1456 = vsel %vm1441, %v1423, %v1017
        %v1457 = vsel %vm1441, %v1424, %v1019
        %v1458 = vsel %vm1441, %v1425, %v1021
        %v1459 = vsel %vm1441, %v1426, %v1023
        %v1460 = vsel %vm1441, %v1427, %v1025
        %v1461 = vsel %vm1441, %v1428, %v1027
        %v1462 = vsel %vm1441, %v1429, %v1029
        %v1463 = vsel %vm1441, %v1430, %v1031
        %v1464 = vsel %vm1441, %v1431, %v1033
        %v1465 = vsel %vm1441, %v1432, %v1035
        %v1466 = vsel %vm1441, %v1433, %v1037
        %v1467 = vsel %vm1441, %v1434, %v1039
        %v1468 = vsel %vm1441, %v1435, %v1041
        %v1469 = vsel %vm1441, %v1436, %v1043
        %v1470 = vsel %vm1441, %v1437, %v1045
        %v1471 = vsel %vm1441, %v1438, %v1047
        %v1472 = vsel %vm1441, %v1439, %v1049
        %v1473 = vsel %vm1441, %v1440, %v1051
        %vm1474 = vcmask 228352
        %v1475 = vsel %vm1474, %v1442, %v1085
        %v1476 = vsel %vm1474, %v1443, %v1087
        %v1477 = vsel %vm1474, %v1444, %v1089
        %v1478 = vsel %vm1474, %v1445, %v1091
        %v1479 = vsel %vm1474, %v1446, %v1093
        %v1480 = vsel %vm1474, %v1447, %v1095
        %v1481 = vsel %vm1474, %v1448, %v1097
        %v1482 = vsel %vm1474, %v1449, %v1099
        %v1483 = vsel %vm1474, %v1450, %v1101
        %v1484 = vsel %vm1474, %v1451, %v1103
        %v1485 = vsel %vm1474, %v1452, %v1105
        %v1486 = vsel %vm1474, %v1453, %v1107
        %v1487 = vsel %vm1474, %v1454, %v1109
        %v1488 = vsel %vm1474, %v1455, %v1111
        %v1489 = vsel %vm1474, %v1456, %v1113
        %v1490 = vsel %vm1474, %v1457, %v1115
        %v1491 = vsel %vm1474, %v1458, %v1117
        %v1492 = vsel %vm1474, %v1459, %v1119
        %v1493 = vsel %vm1474, %v1460, %v1121
        %v1494 = vsel %vm1474, %v1461, %v1123
        %v1495 = vsel %vm1474, %v1462, %v1125
        %v1496 = vsel %vm1474, %v1463, %v1127
        %v1497 = vsel %vm1474, %v1464, %v1129
        %v1498 = vsel %vm1474, %v1465, %v1131
        %v1499 = vsel %vm1474, %v1466, %v1133
        %v1500 = vsel %vm1474, %v1467, %v1135
        %v1501 = vsel %vm1474, %v1468, %v1137
        %v1502 = vsel %vm1474, %v1469, %v1139
        %v1503 = vsel %vm1474, %v1470, %v1141
        %v1504 = vsel %vm1474, %v1471, %v1143
        %v1505 = vsel %vm1474, %v1472, %v1145
        %v1506 = vsel %vm1474, %v1473, %v1147
        %vm1507 = vcmask 261120
        %v1508 = vsel %vm1507, %v1475, %v1181
        %v1509 = vsel %vm1507, %v1476, %v1183
        %v1510 = vsel %vm1507, %v1477, %v1185
        %v1511 = vsel %vm1507, %v1478, %v1187
        %v1512 = vsel %vm1507, %v1479, %v1189
        %v1513 = vsel %vm1507, %v1480, %v1191
        %v1514 = vsel %vm1507, %v1481, %v1193
        %v1515 = vsel %vm1507, %v1482, %v1195
        %v1516 = vsel %vm1507, %v1483, %v1197
        %v1517 = vsel %vm1507, %v1484, %v1199
        %v1518 = vsel %vm1507, %v1485, %v1201
        %v1519 = vsel %vm1507, %v1486, %v1203
        %v1520 = vsel %vm1507, %v1487, %v1205
        %v1521 = vsel %vm1507, %v1488, %v1207
        %v1522 = vsel %vm1507, %v1489, %v1209
        %v1523 = vsel %vm1507, %v1490, %v1211
        %v1524 = vsel %vm1507, %v1491, %v1213
        %v1525 = vsel %vm1507, %v1492, %v1215
        %v1526 = vsel %vm1507, %v1493, %v1217
        %v1527 = vsel %vm1507, %v1494, %v1219
        %v1528 = vsel %vm1507, %v1495, %v1221
        %v1529 = vsel %vm1507, %v1496, %v1223
        %v1530 = vsel %vm1507, %v1497, %v1225
        %v1531 = vsel %vm1507, %v1498, %v1227
        %v1532 = vsel %vm1507, %v1499, %v1229
        %v1533 = vsel %vm1507, %v1500, %v1231
        %v1534 = vsel %vm1507, %v1501, %v1233
        %v1535 = vsel %vm1507, %v1502, %v1235
        %v1536 = vsel %vm1507, %v1503, %v1237
        %v1537 = vsel %vm1507, %v1504, %v1239
        %v1538 = vsel %vm1507, %v1505, %v1241
        %v1539 = vsel %vm1507, %v1506, %v1243
        %v1540 = vpack.c.bf16 %v1509, %v1508
        %v1541 = vpack.c.bf16 %v1511, %v1510
        %v1542 = vpack.c.bf16 %v1513, %v1512
        %v1543 = vpack.c.bf16 %v1515, %v1514
        %v1544 = vpack.c.bf16 %v1517, %v1516
        %v1545 = vpack.c.bf16 %v1519, %v1518
        %v1546 = vpack.c.bf16 %v1521, %v1520
        %v1547 = vpack.c.bf16 %v1523, %v1522
        %v1548 = vpack.c.bf16 %v1525, %v1524
        %v1549 = vpack.c.bf16 %v1527, %v1526
        %v1550 = vpack.c.bf16 %v1529, %v1528
        %v1551 = vpack.c.bf16 %v1531, %v1530
        %v1552 = vpack.c.bf16 %v1533, %v1532
        %v1553 = vpack.c.bf16 %v1535, %v1534
        %v1554 = vpack.c.bf16 %v1537, %v1536
        %v1555 = vpack.c.bf16 %v1539, %v1538
        %v1556 = vld [vmem:[%s1] sm:$0xf]
        %v1557 = vld [vmem:[%s1 + $0x4] sm:$0xf]
        %v1558 = vld [vmem:[%s1 + $0x8] sm:$0xf]
        %v1559 = vld [vmem:[%s1 + $0xc] sm:$0xf]
        %v1560 = vld [vmem:[%s1 + $0x10] sm:$0x3]
        %v1566 = vunpack.c.l.b16 %v1556
        %v1567 = vunpack.c.l.b16 %v1557
        %v1568 = vunpack.c.l.b16 %v1558
        %v1569 = vunpack.c.l.b16 %v1559
        %v1570 = vunpack.c.l.b16 %v1560
        %v1571 = vpack.c.b16 %v1567, %v1566
        %v1572 = vpack.c.b16 %v1569, %v1568
        %v1573 = vpack.c.b16 %v1570, %v1570
        %vm1576 = vcmask 293888
        %v1578 = vsel %vm1576, %v1540, 0
        %v1581 = vsel %vm1576, %v1541, 0
        %v1584 = vsel %vm1576, %v1542, 0
        %v1587 = vsel %vm1576, %v1543, 0
        %v1590 = vsel %vm1576, %v1544, 0
        %v1593 = vsel %vm1576, %v1545, 0
        %v1596 = vsel %vm1576, %v1546, 0
        %v1599 = vsel %vm1576, %v1547, 0
        %v1602 = vsel %vm1576, %v1548, 0
        %v1605 = vsel %vm1576, %v1549, 0
        %v1608 = vsel %vm1576, %v1550, 0
        %v1611 = vsel %vm1576, %v1551, 0
        %v1614 = vsel %vm1576, %v1552, 0
        %v1617 = vsel %vm1576, %v1553, 0
        %v1620 = vsel %vm1576, %v1554, 0
        %v1623 = vsel %vm1576, %v1555, 0
        %vm1625 = vcmask 1041408
        %v1627 = vsel %vm1625, %v1573, 0
        %1629 = vmatprep.subr.bf16.mxu0 0
        %1630 = vmatpush1.bf16.msra.mxu0 0
        %1631 = vmatprep.subr.bf16.mxu0 0
        %1632 = vmatpush1.bf16.msra.mxu0 0
        %1633 = vmatprep.subr.bf16.mxu0 0
        %1634 = vmatpush1.bf16.msra.mxu0 0
        %1635 = vmatprep.subr.bf16.mxu0 0
        %1636 = vmatpush1.bf16.msra.mxu0 0
        %1637 = vmatprep.subr.bf16.mxu0 0
        %1638 = vmatpush1.bf16.msra.mxu0 0
        %1639 = vmatprep.subr.bf16.mxu0 0
        %1640 = vmatpush1.bf16.msra.mxu0 %v1627
        %1641 = vmatprep.subr.bf16.mxu0 0
        %1642 = vmatpush1.bf16.msra.mxu0 %v1572
        %1643 = vmatprep.subr.bf16.mxu0 0
        %1644 = vmatpush1.bf16.msra.mxu0 %v1571
        %1645 = vmatprep.subr.bf16.mxu0 0
        %1646 = vmatpush2.bf16.msra.mxu0 0
        %1647 = vmatprep.subr.bf16.mxu0 0
        %1648 = vmatpush2.bf16.msra.mxu0 0
        %1649 = vmatprep.subr.bf16.mxu0 0
        %1650 = vmatpush2.bf16.msra.mxu0 0
        %1651 = vmatprep.subr.bf16.mxu0 0
        %1652 = vmatpush2.bf16.msra.mxu0 0
        %1653 = vmatprep.subr.bf16.mxu0 0
        %1654 = vmatpush2.bf16.msra.mxu0 0
        %1655 = vmatprep.subr.bf16.mxu0 0
        %1656 = vmatpush2.bf16.msra.mxu0 0
        %1657 = vmatprep.subr.bf16.mxu0 0
        %1658 = vmatpush2.bf16.msra.mxu0 0
        %1659 = vmatprep.subr.bf16.mxu0 0
        %1660 = vmatpush2.bf16.msra.mxu0 0
        %1661 = vmatprep.mubr.bf16.mxu0 0
        %1662 = vmatmul.mubr.bf16.gmra.mxu0 %v1578
        %v1663 = vpop.f32.mrf.mxu0
        %v1664 = vadd.f32 0.0, %v1663
        %v1665 = vpop.f32.mrf.mxu0
        %v1666 = vpop.f32.mrf.mxu0
        %v1667 = vadd.f32 0.0, %v1666
        %v1668 = vpop.f32.mrf.mxu0
        %1669 = vmatprep.mubr.bf16.mxu0 0
        %1670 = vmatmul.mubr.bf16.gmra.mxu0 %v1581
        %v1671 = vpop.f32.mrf.mxu0
        %v1672 = vadd.f32 0.0, %v1671
        %v1673 = vpop.f32.mrf.mxu0
        %v1674 = vpop.f32.mrf.mxu0
        %v1675 = vadd.f32 0.0, %v1674
        %v1676 = vpop.f32.mrf.mxu0
        %1677 = vmatprep.mubr.bf16.mxu0 0
        %1678 = vmatmul.mubr.bf16.gmra.mxu0 %v1584
        %v1679 = vpop.f32.mrf.mxu0
        %v1680 = vadd.f32 0.0, %v1679
        %v1681 = vpop.f32.mrf.mxu0
        %v1682 = vpop.f32.mrf.mxu0
        %v1683 = vadd.f32 0.0, %v1682
        %v1684 = vpop.f32.mrf.mxu0
        %1685 = vmatprep.mubr.bf16.mxu0 0
        %1686 = vmatmul.mubr.bf16.gmra.mxu0 %v1587
        %v1687 = vpop.f32.mrf.mxu0
        %v1688 = vadd.f32 0.0, %v1687
        %v1689 = vpop.f32.mrf.mxu0
        %v1690 = vpop.f32.mrf.mxu0
        %v1691 = vadd.f32 0.0, %v1690
        %v1692 = vpop.f32.mrf.mxu0
        %1693 = vmatprep.mubr.bf16.mxu0 0
        %1694 = vmatmul.mubr.bf16.gmra.mxu0 %v1590
        %v1695 = vpop.f32.mrf.mxu0
        %v1696 = vadd.f32 0.0, %v1695
        %v1697 = vpop.f32.mrf.mxu0
        %v1698 = vpop.f32.mrf.mxu0
        %v1699 = vadd.f32 0.0, %v1698
        %v1700 = vpop.f32.mrf.mxu0
        %1701 = vmatprep.mubr.bf16.mxu0 0
        %1702 = vmatmul.mubr.bf16.gmra.mxu0 %v1593
        %v1703 = vpop.f32.mrf.mxu0
        %v1704 = vadd.f32 0.0, %v1703
        %v1705 = vpop.f32.mrf.mxu0
        %v1706 = vpop.f32.mrf.mxu0
        %v1707 = vadd.f32 0.0, %v1706
        %v1708 = vpop.f32.mrf.mxu0
        %1709 = vmatprep.mubr.bf16.mxu0 0
        %1710 = vmatmul.mubr.bf16.gmra.mxu0 %v1596
        %v1711 = vpop.f32.mrf.mxu0
        %v1712 = vadd.f32 0.0, %v1711
        %v1713 = vpop.f32.mrf.mxu0
        %v1714 = vpop.f32.mrf.mxu0
        %v1715 = vadd.f32 0.0, %v1714
        %v1716 = vpop.f32.mrf.mxu0
        %1717 = vmatprep.mubr.bf16.mxu0 0
        %1718 = vmatmul.mubr.bf16.gmra.mxu0 %v1599
        %v1719 = vpop.f32.mrf.mxu0
        %v1720 = vadd.f32 0.0, %v1719
        %v1721 = vpop.f32.mrf.mxu0
        %v1722 = vpop.f32.mrf.mxu0
        %v1723 = vadd.f32 0.0, %v1722
        %v1724 = vpop.f32.mrf.mxu0
        %1725 = vmatprep.mubr.bf16.mxu0 0
        %1726 = vmatmul.mubr.bf16.gmra.mxu0 %v1602
        %v1727 = vpop.f32.mrf.mxu0
        %v1728 = vadd.f32 0.0, %v1727
        %v1729 = vpop.f32.mrf.mxu0
        %v1730 = vpop.f32.mrf.mxu0
        %v1731 = vadd.f32 0.0, %v1730
        %v1732 = vpop.f32.mrf.mxu0
        %1733 = vmatprep.mubr.bf16.mxu0 0
        %1734 = vmatmul.mubr.bf16.gmra.mxu0 %v1605
        %v1735 = vpop.f32.mrf.mxu0
        %v1736 = vadd.f32 0.0, %v1735
        %v1737 = vpop.f32.mrf.mxu0
        %v1738 = vpop.f32.mrf.mxu0
        %v1739 = vadd.f32 0.0, %v1738
        %v1740 = vpop.f32.mrf.mxu0
        %1741 = vmatprep.mubr.bf16.mxu0 0
        %1742 = vmatmul.mubr.bf16.gmra.mxu0 %v1608
        %v1743 = vpop.f32.mrf.mxu0
        %v1744 = vadd.f32 0.0, %v1743
        %v1745 = vpop.f32.mrf.mxu0
        %v1746 = vpop.f32.mrf.mxu0
        %v1747 = vadd.f32 0.0, %v1746
        %v1748 = vpop.f32.mrf.mxu0
        %1749 = vmatprep.mubr.bf16.mxu0 0
        %1750 = vmatmul.mubr.bf16.gmra.mxu0 %v1611
        %v1751 = vpop.f32.mrf.mxu0
        %v1752 = vadd.f32 0.0, %v1751
        %v1753 = vpop.f32.mrf.mxu0
        %v1754 = vpop.f32.mrf.mxu0
        %v1755 = vadd.f32 0.0, %v1754
        %v1756 = vpop.f32.mrf.mxu0
        %1757 = vmatprep.mubr.bf16.mxu0 0
        %1758 = vmatmul.mubr.bf16.gmra.mxu0 %v1614
        %v1759 = vpop.f32.mrf.mxu0
        %v1760 = vadd.f32 0.0, %v1759
        %v1761 = vpop.f32.mrf.mxu0
        %v1762 = vpop.f32.mrf.mxu0
        %v1763 = vadd.f32 0.0, %v1762
        %v1764 = vpop.f32.mrf.mxu0
        %1765 = vmatprep.mubr.bf16.mxu0 0
        %1766 = vmatmul.mubr.bf16.gmra.mxu0 %v1617
        %v1767 = vpop.f32.mrf.mxu0
        %v1768 = vadd.f32 0.0, %v1767
        %v1769 = vpop.f32.mrf.mxu0
        %v1770 = vpop.f32.mrf.mxu0
        %v1771 = vadd.f32 0.0, %v1770
        %v1772 = vpop.f32.mrf.mxu0
        %1773 = vmatprep.mubr.bf16.mxu0 0
        %1774 = vmatmul.mubr.bf16.gmra.mxu0 %v1620
        %v1775 = vpop.f32.mrf.mxu0
        %v1776 = vadd.f32 0.0, %v1775
        %v1777 = vpop.f32.mrf.mxu0
        %v1778 = vpop.f32.mrf.mxu0
        %v1779 = vadd.f32 0.0, %v1778
        %v1780 = vpop.f32.mrf.mxu0
        %1781 = vmatprep.mubr.bf16.mxu0 0
        %1782 = vmatmul.mubr.bf16.gmra.mxu0 %v1623
        %v1783 = vpop.f32.mrf.mxu0
        %v1784 = vadd.f32 0.0, %v1783
        %v1785 = vpop.f32.mrf.mxu0
        %v1786 = vpop.f32.mrf.mxu0
        %v1787 = vadd.f32 0.0, %v1786
        %v1788 = vpop.f32.mrf.mxu0
        %1789 = vdwg.mxu0
        %v1790 = vsel %vm1309, %v1664, 0.0
        %v1791 = vsel %vm1309, %v1667, 0.0
        %v1792 = vadd.f32 %v1790, %v1791
        %v1793 = vsel %vm1309, %v1672, 0.0
        %v1794 = vadd.f32 %v1792, %v1793
        %v1795 = vsel %vm1309, %v1675, 0.0
        %v1796 = vadd.f32 %v1794, %v1795
        %v1797 = vsel %vm1309, %v1680, 0.0
        %v1798 = vadd.f32 %v1796, %v1797
        %v1799 = vsel %vm1309, %v1683, 0.0
        %v1800 = vadd.f32 %v1798, %v1799
        %v1801 = vsel %vm1309, %v1688, 0.0
        %v1802 = vadd.f32 %v1800, %v1801
        %v1803 = vsel %vm1309, %v1691, 0.0
        %v1804 = vadd.f32 %v1802, %v1803
        %v1805 = vsel %vm1309, %v1696, 0.0
        %v1806 = vadd.f32 %v1804, %v1805
        %v1807 = vsel %vm1309, %v1699, 0.0
        %v1808 = vadd.f32 %v1806, %v1807
        %v1809 = vsel %vm1309, %v1704, 0.0
        %v1810 = vadd.f32 %v1808, %v1809
        %v1811 = vsel %vm1309, %v1707, 0.0
        %v1812 = vadd.f32 %v1810, %v1811
        %v1813 = vsel %vm1309, %v1712, 0.0
        %v1814 = vadd.f32 %v1812, %v1813
        %v1815 = vsel %vm1309, %v1715, 0.0
        %v1816 = vadd.f32 %v1814, %v1815
        %v1817 = vsel %vm1309, %v1720, 0.0
        %v1818 = vadd.f32 %v1816, %v1817
        %v1819 = vsel %vm1309, %v1723, 0.0
        %v1820 = vadd.f32 %v1818, %v1819
        %v1821 = vsel %vm1309, %v1728, 0.0
        %v1822 = vadd.f32 %v1820, %v1821
        %v1823 = vsel %vm1309, %v1731, 0.0
        %v1824 = vadd.f32 %v1822, %v1823
        %v1825 = vsel %vm1309, %v1736, 0.0
        %v1826 = vadd.f32 %v1824, %v1825
        %v1827 = vsel %vm1309, %v1739, 0.0
        %v1828 = vadd.f32 %v1826, %v1827
        %v1829 = vsel %vm1309, %v1744, 0.0
        %v1830 = vadd.f32 %v1828, %v1829
        %v1831 = vsel %vm1309, %v1747, 0.0
        %v1832 = vadd.f32 %v1830, %v1831
        %v1833 = vsel %vm1309, %v1752, 0.0
        %v1834 = vadd.f32 %v1832, %v1833
        %v1835 = vsel %vm1309, %v1755, 0.0
        %v1836 = vadd.f32 %v1834, %v1835
        %v1837 = vsel %vm1309, %v1760, 0.0
        %v1838 = vadd.f32 %v1836, %v1837
        %v1839 = vsel %vm1309, %v1763, 0.0
        %v1840 = vadd.f32 %v1838, %v1839
        %v1841 = vsel %vm1309, %v1768, 0.0
        %v1842 = vadd.f32 %v1840, %v1841
        %v1843 = vsel %vm1309, %v1771, 0.0
        %v1844 = vadd.f32 %v1842, %v1843
        %v1845 = vsel %vm1309, %v1776, 0.0
        %v1846 = vadd.f32 %v1844, %v1845
        %v1847 = vsel %vm1309, %v1779, 0.0
        %v1848 = vadd.f32 %v1846, %v1847
        %v1849 = vsel %vm1309, %v1784, 0.0
        %v1850 = vadd.f32 %v1848, %v1849
        %v1851 = vsel %vm1309, %v1787, 0.0
        %v1852 = vadd.f32 %v1850, %v1851
        %v1853 = vrot.slane %v1852, 4
        %v1854 = vadd.f32 %v1852, %v1853
        %v1855 = vrot.slane %v1854, 2
        %v1856 = vadd.f32 %v1854, %v1855
        %v1857 = vrot.slane %v1856, 1
        %v1858 = vadd.f32 %v1856, %v1857
        %vm1859 = vcmask 57344
        %1860 = vst.msk [vmem:[%s200] sm:$0x1] %vm1859, %v1858
        %v1861 = vmul.f32 %v1664, %v1664
        %v1862 = vmul.f32 %v1667, %v1667
        %v1863 = vmul.f32 %v1672, %v1672
        %v1864 = vmul.f32 %v1675, %v1675
        %v1865 = vmul.f32 %v1680, %v1680
        %v1866 = vmul.f32 %v1683, %v1683
        %v1867 = vmul.f32 %v1688, %v1688
        %v1868 = vmul.f32 %v1691, %v1691
        %v1869 = vmul.f32 %v1696, %v1696
        %v1870 = vmul.f32 %v1699, %v1699
        %v1871 = vmul.f32 %v1704, %v1704
        %v1872 = vmul.f32 %v1707, %v1707
        %v1873 = vmul.f32 %v1712, %v1712
        %v1874 = vmul.f32 %v1715, %v1715
        %v1875 = vmul.f32 %v1720, %v1720
        %v1876 = vmul.f32 %v1723, %v1723
        %v1877 = vmul.f32 %v1728, %v1728
        %v1878 = vmul.f32 %v1731, %v1731
        %v1879 = vmul.f32 %v1736, %v1736
        %v1880 = vmul.f32 %v1739, %v1739
        %v1881 = vmul.f32 %v1744, %v1744
        %v1882 = vmul.f32 %v1747, %v1747
        %v1883 = vmul.f32 %v1752, %v1752
        %v1884 = vmul.f32 %v1755, %v1755
        %v1885 = vmul.f32 %v1760, %v1760
        %v1886 = vmul.f32 %v1763, %v1763
        %v1887 = vmul.f32 %v1768, %v1768
        %v1888 = vmul.f32 %v1771, %v1771
        %v1889 = vmul.f32 %v1776, %v1776
        %v1890 = vmul.f32 %v1779, %v1779
        %v1891 = vmul.f32 %v1784, %v1784
        %v1892 = vmul.f32 %v1787, %v1787
        %v1893 = vsel %vm1309, %v1861, 0.0
        %v1894 = vsel %vm1309, %v1862, 0.0
        %v1895 = vadd.f32 %v1893, %v1894
        %v1896 = vsel %vm1309, %v1863, 0.0
        %v1897 = vadd.f32 %v1895, %v1896
        %v1898 = vsel %vm1309, %v1864, 0.0
        %v1899 = vadd.f32 %v1897, %v1898
        %v1900 = vsel %vm1309, %v1865, 0.0
        %v1901 = vadd.f32 %v1899, %v1900
        %v1902 = vsel %vm1309, %v1866, 0.0
        %v1903 = vadd.f32 %v1901, %v1902
        %v1904 = vsel %vm1309, %v1867, 0.0
        %v1905 = vadd.f32 %v1903, %v1904
        %v1906 = vsel %vm1309, %v1868, 0.0
        %v1907 = vadd.f32 %v1905, %v1906
        %v1908 = vsel %vm1309, %v1869, 0.0
        %v1909 = vadd.f32 %v1907, %v1908
        %v1910 = vsel %vm1309, %v1870, 0.0
        %v1911 = vadd.f32 %v1909, %v1910
        %v1912 = vsel %vm1309, %v1871, 0.0
        %v1913 = vadd.f32 %v1911, %v1912
        %v1914 = vsel %vm1309, %v1872, 0.0
        %v1915 = vadd.f32 %v1913, %v1914
        %v1916 = vsel %vm1309, %v1873, 0.0
        %v1917 = vadd.f32 %v1915, %v1916
        %v1918 = vsel %vm1309, %v1874, 0.0
        %v1919 = vadd.f32 %v1917, %v1918
        %v1920 = vsel %vm1309, %v1875, 0.0
        %v1921 = vadd.f32 %v1919, %v1920
        %v1922 = vsel %vm1309, %v1876, 0.0
        %v1923 = vadd.f32 %v1921, %v1922
        %v1924 = vsel %vm1309, %v1877, 0.0
        %v1925 = vadd.f32 %v1923, %v1924
        %v1926 = vsel %vm1309, %v1878, 0.0
        %v1927 = vadd.f32 %v1925, %v1926
        %v1928 = vsel %vm1309, %v1879, 0.0
        %v1929 = vadd.f32 %v1927, %v1928
        %v1930 = vsel %vm1309, %v1880, 0.0
        %v1931 = vadd.f32 %v1929, %v1930
        %v1932 = vsel %vm1309, %v1881, 0.0
        %v1933 = vadd.f32 %v1931, %v1932
        %v1934 = vsel %vm1309, %v1882, 0.0
        %v1935 = vadd.f32 %v1933, %v1934
        %v1936 = vsel %vm1309, %v1883, 0.0
        %v1937 = vadd.f32 %v1935, %v1936
        %v1938 = vsel %vm1309, %v1884, 0.0
        %v1939 = vadd.f32 %v1937, %v1938
        %v1940 = vsel %vm1309, %v1885, 0.0
        %v1941 = vadd.f32 %v1939, %v1940
        %v1942 = vsel %vm1309, %v1886, 0.0
        %v1943 = vadd.f32 %v1941, %v1942
        %v1944 = vsel %vm1309, %v1887, 0.0
        %v1945 = vadd.f32 %v1943, %v1944
        %v1946 = vsel %vm1309, %v1888, 0.0
        %v1947 = vadd.f32 %v1945, %v1946
        %v1948 = vsel %vm1309, %v1889, 0.0
        %v1949 = vadd.f32 %v1947, %v1948
        %v1950 = vsel %vm1309, %v1890, 0.0
        %v1951 = vadd.f32 %v1949, %v1950
        %v1952 = vsel %vm1309, %v1891, 0.0
        %v1953 = vadd.f32 %v1951, %v1952
        %v1954 = vsel %vm1309, %v1892, 0.0
        %v1955 = vadd.f32 %v1953, %v1954
        %v1956 = vrot.slane %v1955, 4
        %v1957 = vadd.f32 %v1955, %v1956
        %v1958 = vrot.slane %v1957, 2
        %v1959 = vadd.f32 %v1957, %v1958
        %v1960 = vrot.slane %v1959, 1
        %v1961 = vadd.f32 %v1959, %v1960
        %1962 = vst.msk [vmem:[%s206] sm:$0x1] %vm1859, %v1961
        %v1963 = vpack.c.bf16 %v1667, %v1664
        %v1964 = vpack.c.bf16 %v1675, %v1672
        %v1965 = vpack.c.bf16 %v1683, %v1680
        %v1966 = vpack.c.bf16 %v1691, %v1688
        %v1967 = vpack.c.bf16 %v1699, %v1696
        %v1968 = vpack.c.bf16 %v1707, %v1704
        %v1969 = vpack.c.bf16 %v1715, %v1712
        %v1970 = vpack.c.bf16 %v1723, %v1720
        %v1971 = vpack.c.bf16 %v1731, %v1728
        %v1972 = vpack.c.bf16 %v1739, %v1736
        %v1973 = vpack.c.bf16 %v1747, %v1744
        %v1974 = vpack.c.bf16 %v1755, %v1752
        %v1975 = vpack.c.bf16 %v1763, %v1760
        %v1976 = vpack.c.bf16 %v1771, %v1768
        %v1977 = vpack.c.bf16 %v1779, %v1776
        %v1978 = vpack.c.bf16 %v1787, %v1784
        %v1995 = vunpack.c.l.b16 %v1963
        %v1996 = vunpack.c.h.b16 %v1963
        %v1997 = vunpack.c.l.b16 %v1964
        %v1998 = vunpack.c.h.b16 %v1964
        %v1999 = vunpack.c.l.b16 %v1965
        %v2000 = vunpack.c.h.b16 %v1965
        %v2001 = vunpack.c.l.b16 %v1966
        %v2002 = vunpack.c.h.b16 %v1966
        %v2003 = vunpack.c.l.b16 %v1967
        %v2004 = vunpack.c.h.b16 %v1967
        %v2005 = vunpack.c.l.b16 %v1968
        %v2006 = vunpack.c.h.b16 %v1968
        %v2007 = vunpack.c.l.b16 %v1969
        %v2008 = vunpack.c.h.b16 %v1969
        %v2009 = vunpack.c.l.b16 %v1970
        %v2010 = vunpack.c.h.b16 %v1970
        %v2011 = vunpack.c.l.b16 %v1971
        %v2012 = vunpack.c.h.b16 %v1971
        %v2013 = vunpack.c.l.b16 %v1972
        %v2014 = vunpack.c.h.b16 %v1972
        %v2015 = vunpack.c.l.b16 %v1973
        %v2016 = vunpack.c.h.b16 %v1973
        %v2017 = vunpack.c.l.b16 %v1974
        %v2018 = vunpack.c.h.b16 %v1974
        %v2019 = vunpack.c.l.b16 %v1975
        %v2020 = vunpack.c.h.b16 %v1975
        %v2021 = vunpack.c.l.b16 %v1976
        %v2022 = vunpack.c.h.b16 %v1976
        %v2023 = vunpack.c.l.b16 %v1977
        %v2024 = vunpack.c.h.b16 %v1977
        %v2025 = vunpack.c.l.b16 %v1978
        %v2026 = vunpack.c.h.b16 %v1978
        %v2027 = vpack.c.b16 %v1995, %v1995
        %v2028 = vpack.c.b16 %v1996, %v1996
        %v2029 = vpack.c.b16 %v1997, %v1997
        %v2030 = vpack.c.b16 %v1998, %v1998
        %v2031 = vpack.c.b16 %v1999, %v1999
        %v2032 = vpack.c.b16 %v2000, %v2000
        %v2033 = vpack.c.b16 %v2001, %v2001
        %v2034 = vpack.c.b16 %v2002, %v2002
        %v2035 = vpack.c.b16 %v2003, %v2003
        %v2036 = vpack.c.b16 %v2004, %v2004
        %v2037 = vpack.c.b16 %v2005, %v2005
        %v2038 = vpack.c.b16 %v2006, %v2006
        %v2039 = vpack.c.b16 %v2007, %v2007
        %v2040 = vpack.c.b16 %v2008, %v2008
        %v2041 = vpack.c.b16 %v2009, %v2009
        %v2042 = vpack.c.b16 %v2010, %v2010
        %v2043 = vpack.c.b16 %v2011, %v2011
        %v2044 = vpack.c.b16 %v2012, %v2012
        %v2045 = vpack.c.b16 %v2013, %v2013
        %v2046 = vpack.c.b16 %v2014, %v2014
        %v2047 = vpack.c.b16 %v2015, %v2015
        %v2048 = vpack.c.b16 %v2016, %v2016
        %v2049 = vpack.c.b16 %v2017, %v2017
        %v2050 = vpack.c.b16 %v2018, %v2018
        %v2051 = vpack.c.b16 %v2019, %v2019
        %v2052 = vpack.c.b16 %v2020, %v2020
        %v2053 = vpack.c.b16 %v2021, %v2021
        %v2054 = vpack.c.b16 %v2022, %v2022
        %v2055 = vpack.c.b16 %v2023, %v2023
        %v2056 = vpack.c.b16 %v2024, %v2024
        %v2057 = vpack.c.b16 %v2025, %v2025
        %v2058 = vpack.c.b16 %v2026, %v2026
        %vm2091 = vcmask 60416
        %2092 = vst.msk [vmem:[%s216] sm:$0xf] %vm2091, %v2027
        %2093 = vst.msk [vmem:[%s216 + $0x4] sm:$0xf] %vm2091, %v2028
        %2094 = vst.msk [vmem:[%s216 + $0x8] sm:$0xf] %vm2091, %v2029
        %2095 = vst.msk [vmem:[%s216 + $0xc] sm:$0xf] %vm2091, %v2030
        %2096 = vst.msk [vmem:[%s216 + $0x10] sm:$0xf] %vm2091, %v2031
        %2097 = vst.msk [vmem:[%s216 + $0x14] sm:$0xf] %vm2091, %v2032
        %2098 = vst.msk [vmem:[%s216 + $0x18] sm:$0xf] %vm2091, %v2033
        %2099 = vst.msk [vmem:[%s216 + $0x1c] sm:$0xf] %vm2091, %v2034
        %2100 = vst.msk [vmem:[%s216 + $0x20] sm:$0xf] %vm2091, %v2035
        %2101 = vst.msk [vmem:[%s216 + $0x24] sm:$0xf] %vm2091, %v2036
        %2102 = vst.msk [vmem:[%s216 + $0x28] sm:$0xf] %vm2091, %v2037
        %2103 = vst.msk [vmem:[%s216 + $0x2c] sm:$0xf] %vm2091, %v2038
        %2104 = vst.msk [vmem:[%s216 + $0x30] sm:$0xf] %vm2091, %v2039
        %2105 = vst.msk [vmem:[%s216 + $0x34] sm:$0xf] %vm2091, %v2040
        %2106 = vst.msk [vmem:[%s216 + $0x38] sm:$0xf] %vm2091, %v2041
        %2107 = vst.msk [vmem:[%s216 + $0x3c] sm:$0xf] %vm2091, %v2042
        %2108 = vst.msk [vmem:[%s216 + $0x40] sm:$0xf] %vm2091, %v2043
        %2109 = vst.msk [vmem:[%s216 + $0x44] sm:$0xf] %vm2091, %v2044
        %2110 = vst.msk [vmem:[%s216 + $0x48] sm:$0xf] %vm2091, %v2045
        %2111 = vst.msk [vmem:[%s216 + $0x4c] sm:$0xf] %vm2091, %v2046
        %2112 = vst.msk [vmem:[%s216 + $0x50] sm:$0xf] %vm2091, %v2047
        %2113 = vst.msk [vmem:[%s216 + $0x54] sm:$0xf] %vm2091, %v2048
        %2114 = vst.msk [vmem:[%s216 + $0x58] sm:$0xf] %vm2091, %v2049
        %2115 = vst.msk [vmem:[%s216 + $0x5c] sm:$0xf] %vm2091, %v2050
        %2116 = vst.msk [vmem:[%s216 + $0x60] sm:$0xf] %vm2091, %v2051
        %2117 = vst.msk [vmem:[%s216 + $0x64] sm:$0xf] %vm2091, %v2052
        %2118 = vst.msk [vmem:[%s216 + $0x68] sm:$0xf] %vm2091, %v2053
        %2119 = vst.msk [vmem:[%s216 + $0x6c] sm:$0xf] %vm2091, %v2054
        %2120 = vst.msk [vmem:[%s216 + $0x70] sm:$0xf] %vm2091, %v2055
        %2121 = vst.msk [vmem:[%s216 + $0x74] sm:$0xf] %vm2091, %v2056
        %2122 = vst.msk [vmem:[%s216 + $0x78] sm:$0xf] %vm2091, %v2057
        %2123 = vst.msk [vmem:[%s216 + $0x7c] sm:$0xf] %vm2091, %v2058
        %p2124 = scmp.lt.s32.totalorder %s22, 1
        %s2125 = scalar_select %p2124, %s22, 1
        %s2126 = smul.addr %s2125, 32
        %s2127 = smul.addr %s2126, 4
        %s2128 = scalar_lea.vmem %s2, %s2127
        %s2129 = sand.u32 %s103, 1
        %s2130 = scalar_lea.sflag [#allocation3], %s2129
        %s2131 = sand.u32 %s103, 1
        %s2132 = scalar_lea.vmem [#allocation2], %s2131
        %s2133 = sand.u32 %s129, 1
        %s2134 = scalar_lea.sflag [#allocation5], %s2133
        %s2135 = sand.u32 %s129, 1
        %s2136 = scalar_lea.vmem [#allocation4], %s2135
        // Predicated region
        $region29: #{tpu_custom_call.1} parent=27 // pred_check
          %p2137 = pneg %p87
        $region30: #{tpu_custom_call.1} parent=27 // pred_check_branch
          %2139 = sbr.rel (%p2137) target = $region32
        $region31: #{tpu_custom_call.1} parent=27 // pred_region
          _
        $region32: #{tpu_custom_call.1} parent=27 // pred_fallthru
          _
        // Predicated region
        $region33: #{tpu_custom_call.1} parent=27 // pred_check
          %p2140 = pneg %p113
        $region34: #{tpu_custom_call.1} parent=27 // pred_check_branch
          %2142 = sbr.rel (%p2140) target = $region36
        $region35: #{tpu_custom_call.1} parent=27 // pred_region
          %s2144 = ssub.s32 16, 16
          %2145 = vsyncadd %s2130, %s2144
          %s2146 = smul.addr %s22, 16
          %s2147 = scalar_lea.hbm %s3, %s2146
          %s2149 = sshll.u32 %s2132, 4
          %s2150 = int_to_ptr.vmem [resolvable:$true] %s2149
          %2152 = dma.vmem_to_hbm [thread:$0]  %s2150, 16, %s2147, %s2130
        $region36: #{tpu_custom_call.1} parent=27 // pred_fallthru
          _
        // Predicated region
        $region37: #{tpu_custom_call.1} parent=27 // pred_check
          %p2153 = pneg %p139
        $region38: #{tpu_custom_call.1} parent=27 // pred_check_branch
          %2155 = sbr.rel (%p2153) target = $region40
        $region39: #{tpu_custom_call.1} parent=27 // pred_region
          %s2157 = ssub.s32 16, 16
          %2158 = vsyncadd %s2134, %s2157
          %s2159 = smul.addr %s22, 16
          %s2160 = scalar_lea.hbm %s4, %s2159
          %s2162 = sshll.u32 %s2136, 4
          %s2163 = int_to_ptr.vmem [resolvable:$true] %s2162
          %2165 = dma.vmem_to_hbm [thread:$0]  %s2163, 16, %s2160, %s2134
        $region40: #{tpu_custom_call.1} parent=27 // pred_fallthru
          _
      $region28: #{tpu_custom_call.1} parent=5 // pred_fallthru
        _
      %p2166 = scmp.le.s32.totalorder 2, %s17
      // Predicated region
      $region41: #{tpu_custom_call.1} parent=5 // pred_check
        %p2167 = pneg %p2166
      $region42: #{tpu_custom_call.1} parent=5 // pred_check_branch
        %2169 = sbr.rel (%p2167) target = $region44
      $region43: #{tpu_custom_call.1} parent=5 // pred_region
        %s2170 = ssub.s32 %s17, 2
        // Predicated region
        $region45: #{tpu_custom_call.1} parent=43 // pred_check
          %p2171 = pneg %p93
        $region46: #{tpu_custom_call.1} parent=43 // pred_check_branch
          %2173 = sbr.rel (%p2171) target = $region48
        $region47: #{tpu_custom_call.1} parent=43 // pred_region
          %p2174 = scmp.lt.s32.totalorder %s23, 1
          %s2175 = scalar_select %p2174, %s23, 1
          %s2176 = smul.addr %s2175, 32
          %s2177 = smul.addr %s2176, 4
          %s2178 = scalar_lea.vmem %s2, %s2177
        $region48: #{tpu_custom_call.1} parent=43 // pred_fallthru
          _
        // Predicated region
        $region49: #{tpu_custom_call.1} parent=43 // pred_check
          %p2179 = pneg %p119
        $region50: #{tpu_custom_call.1} parent=43 // pred_check_branch
          %2181 = sbr.rel (%p2179) target = $region52
        $region51: #{tpu_custom_call.1} parent=43 // pred_region
          %s2182 = sand.u32 %s104, 1
          %s2183 = scalar_lea.sflag [#allocation3], %s2182
          %s2184 = sand.u32 %s104, 1
          %s2185 = scalar_lea.vmem [#allocation2], %s2184
          %2186 = dma.done %s2183, 16
        $region52: #{tpu_custom_call.1} parent=43 // pred_fallthru
          _
        // Predicated region
        $region53: #{tpu_custom_call.1} parent=43 // pred_check
          %p2187 = pneg %p145
        $region54: #{tpu_custom_call.1} parent=43 // pred_check_branch
          %2189 = sbr.rel (%p2187) target = $region56
        $region55: #{tpu_custom_call.1} parent=43 // pred_region
          %s2190 = sand.u32 %s130, 1
          %s2191 = scalar_lea.sflag [#allocation5], %s2190
          %s2192 = sand.u32 %s130, 1
          %s2193 = scalar_lea.vmem [#allocation4], %s2192
          %2194 = dma.done %s2191, 16
        $region56: #{tpu_custom_call.1} parent=43 // pred_fallthru
          _
      $region44: #{tpu_custom_call.1} parent=5 // pred_fallthru
        _
    $region6: #{tpu_custom_call.1} parent=1 // loop_footer
      %s21 = sadd.s32 1, %s17
    $region7: #{tpu_custom_call.1} parent=1 // loop_footer_branch
      %16 = sbr.rel target = $region3
    $region8: #{tpu_custom_call.1} parent=1 // loop_exit
      _
    %2195 = vsyncpa [#allocation3], 1
    %s2196 = scalar_lea.sflag [#allocation3], 1
    %2197 = vsyncpa %s2196, 1
    %2198 = vsyncpa [#allocation5], 1
    %s2199 = scalar_lea.sflag [#allocation5], 1
    %2200 = vsyncpa %s2199, 1

</llo_original>
